<compile_context>
chip_gen: v5e
topology: v5e:2x2
jax: 0.10.0
libtpu: 0.0.40
codegen_flags: <defaults>
</compile_context>

<pallas_src>
import functools

import jax
import jax.numpy as jnp
from jax import lax
from jax.experimental import pallas as pl
from jax.experimental.pallas import tpu as pltpu


HIDDEN = 64        # PyTorch hidden_size
HP = 128           # per-gate lane-padded hidden
F1, F1P = 200, 256  # fc1 width, lane-padded
F2, F2P = 100, 128  # fc2 width, lane-padded


# ----------------------------- Pallas kernel --------------------------------
def critic_kernel(state_ref, act_ref,
                  wih_ref, whh_ref, b_lstm_ref,
                  w1h_ref, w1a_ref, b1_ref,
                  w2_ref, b2_ref, w3_ref, b3_ref,
                  out_ref):
    TB, S = state_ref.shape          # (T*B, S), time-major rows
    Hp = whh_ref.shape[0]            # 128 (lane-padded hidden per gate)
    B = act_ref.shape[0]
    T = TB // B
    bf16 = jnp.bfloat16

    # ---- loop-invariant loads (hoisted) -------------------------------------
    whh = whh_ref[...]               # (Hp, 4*Hp) bf16
    b_lstm = b_lstm_ref[...]         # (1, 4*Hp)  f32

    # ---- hoisted input projection: one big matmul instead of T tiny ones ----
    gates_x = jnp.dot(state_ref[...].astype(bf16), wih_ref[...],
                      preferred_element_type=jnp.float32) + b_lstm   # (T*B, 4Hp)

    # ---- LSTM recurrence, fully unrolled (T small & static) -----------------
    h = jnp.zeros((B, Hp), jnp.float32)
    c = jnp.zeros((B, Hp), jnp.float32)
    for t in range(T):               # static unroll; only h @ W_hh per step
        gates = gates_x[t * B:(t + 1) * B, :] + jnp.dot(
            h.astype(bf16), whh, preferred_element_type=jnp.float32)
        # PyTorch gate order i, f, g, o; each gate is a full 128-lane block.
        i_g = jax.nn.sigmoid(gates[:, 0 * Hp:1 * Hp])
        f_g = jax.nn.sigmoid(gates[:, 1 * Hp:2 * Hp])
        g_g = jnp.tanh(gates[:, 2 * Hp:3 * Hp])
        o_g = jax.nn.sigmoid(gates[:, 3 * Hp:4 * Hp])
        c = f_g * c + i_g * g_g
        h = o_g * jnp.tanh(c)        # padded lanes stay exactly 0

    a = act_ref[...]                 # (B, A) == action[:, -1]

    # ---- MLP head (lane-padded widths) ---------------------------------------
    # fc1 + relu:  cat([h, a]) @ W1.T  ==  h @ W1h + a @ W1a
    x = (jnp.dot(h.astype(bf16), w1h_ref[...], preferred_element_type=jnp.float32)
         + jnp.dot(a.astype(bf16), w1a_ref[...], preferred_element_type=jnp.float32)
         + b1_ref[...])
    x = jnp.maximum(x, 0.0)
    # fc2 + relu
    x = jnp.maximum(jnp.dot(x.astype(bf16), w2_ref[...],
                            preferred_element_type=jnp.float32) + b2_ref[...], 0.0)
    # fc3 (N=1): VPU multiply + lane reduce instead of an MXU pass.
    out_ref[...] = jnp.sum(x * w3_ref[...], axis=-1, keepdims=True) + b3_ref[...]


# ------------------------------ wrapper --------------------------------------
@jax.jit
def critic_forward(state, action, kparams):
    """state: (B, T, S), action: (B, T, A) — batch_first, like the PyTorch module."""
    B, T, S = state.shape
    # Time-major rows (row r = t*B + b) feed the hoisted input projection.
    state_tm = jnp.transpose(state, (1, 0, 2)).reshape(T * B, S)
    act_last = action[:, -1, :]                        # (B, A)

    vmem = pl.BlockSpec(memory_space=pltpu.MemorySpace.VMEM)
    args = (state_tm, act_last,
            kparams['wih'], kparams['whh'], kparams['b_lstm'],
            kparams['w1h'], kparams['w1a'], kparams['b1'],
            kparams['w2'], kparams['b2'], kparams['w3'], kparams['b3'])

    return pl.pallas_call(
        critic_kernel,
        out_shape=jax.ShapeDtypeStruct((B, 1), jnp.float32),
        in_specs=[vmem] * len(args),
        out_specs=vmem,
    )(*args)


# ------------------------- deterministic parameters --------------------------
def init_params(key, state_size, action_size, hidden_size=HIDDEN):
    """Unpadded f32 params (transposed to (in, out)) — used by the reference."""
    H, S, A = hidden_size, state_size, action_size
    ks = jax.random.split(key, 6)
    lim = 1.0 / jnp.sqrt(jnp.float32(H))

    w_ih = jax.random.uniform(ks[0], (4 * H, S), minval=-lim, maxval=lim)
    w_hh = jax.random.uniform(ks[1], (4 * H, H), minval=-lim, maxval=lim)
    b_ih = jax.random.uniform(ks[2], (4 * H,), minval=-lim, maxval=lim)
    b_hh = jnp.full((4 * H,), -0.2, jnp.float32)   # lstm.bias_hh_l0.data.fill_(-0.2)

    def linear(k, fan_in, fan_out):
        l = 1.0 / jnp.sqrt(jnp.float32(fan_in))
        kw, kb = jax.random.split(k)
        W = jax.random.uniform(kw, (fan_out, fan_in), minval=-l, maxval=l)
        b = jax.random.uniform(kb, (fan_out,), minval=-l, maxval=l)
        return W, b

    W1, b1 = linear(ks[3], H + A, F1)
    W2, b2 = linear(ks[4], F1, F2)
    W3, b3 = linear(ks[5], F2, 1)

    f32 = lambda x: x.astype(jnp.float32)
    return dict(
        wih_t=f32(w_ih.T),                         # (S, 4H)
        whh_t=f32(w_hh.T),                         # (H, 4H)
        b_lstm=f32((b_ih + b_hh).reshape(1, 4 * H)),
        w1h_t=f32(W1[:, :H].T),                    # (H, F1)
        w1a_t=f32(W1[:, H:].T),                    # (A, F1)
        b1=f32(b1.reshape(1, -1)),
        w2_t=f32(W2.T), b2=f32(b2.reshape(1, -1)),
        w3_t=f32(W3.T), b3=f32(b3.reshape(1, -1)),
    )


def pack_params(p, hidden_size=HIDDEN):
    """Lane-pad + bf16-cast params for the kernel. Padded lanes are exact zeros."""
    H, Hp = hidden_size, HP

    def pad_gate_cols(w):          # (in, 4H) -> (in, 4*Hp), per-gate zero pad
        blocks = [jnp.pad(w[:, g * H:(g + 1) * H], ((0, 0), (0, Hp - H)))
                  for g in range(4)]
        return jnp.concatenate(blocks, axis=1)

    wih = pad_gate_cols(p['wih_t'])                               # (S, 4Hp)
    whh = jnp.pad(pad_gate_cols(p['whh_t']), ((0, Hp - H), (0, 0)))   # (Hp, 4Hp)
    b_lstm = pad_gate_cols(p['b_lstm'])                           # (1, 4Hp)

    w1h = jnp.pad(p['w1h_t'], ((0, Hp - H), (0, F1P - F1)))       # (Hp, F1P)
    w1a = jnp.pad(p['w1a_t'], ((0, 0), (0, F1P - F1)))            # (A, F1P)
    b1 = jnp.pad(p['b1'], ((0, 0), (0, F1P - F1)))                # (1, F1P)
    w2 = jnp.pad(p['w2_t'], ((0, F1P - F1), (0, F2P - F2)))       # (F1P, F2P)
    b2 = jnp.pad(p['b2'], ((0, 0), (0, F2P - F2)))                # (1, F2P)
    w3 = jnp.pad(p['w3_t'].T, ((0, 0), (0, F2P - F2)))            # (1, F2P) row vec
    b3 = p['b3']                                                  # (1, 1)

    bf16 = lambda x: x.astype(jnp.bfloat16)
    f32 = lambda x: x.astype(jnp.float32)
    return dict(wih=bf16(wih), whh=bf16(whh), b_lstm=f32(b_lstm),
                w1h=bf16(w1h), w1a=bf16(w1a), b1=f32(b1),
                w2=bf16(w2), b2=f32(b2),
                w3=f32(w3), b3=f32(b3))


# --------------------------- pure-JAX reference -------------------------------
def critic_ref(state, action, params):
    B, T, S = state.shape
    H = params['whh_t'].shape[0]

    def step(carry, x_t):
        h, c = carry
        gates = x_t @ params['wih_t'] + h @ params['whh_t'] + params['b_lstm'][0]
        i = jax.nn.sigmoid(gates[:, :H])
        f = jax.nn.sigmoid(gates[:, H:2 * H])
        g = jnp.tanh(gates[:, 2 * H:3 * H])
        o = jax.nn.sigmoid(gates[:, 3 * H:4 * H])
        c = f * c + i * g
        h = o * jnp.tanh(c)
        return (h, c), None

    init = (jnp.zeros((B, H), jnp.float32), jnp.zeros((B, H), jnp.float32))
    (h, _), _ = lax.scan(step, init, jnp.transpose(state, (1, 0, 2)))
    a = action[:, -1]
    x = jax.nn.relu(h @ params['w1h_t'] + a @ params['w1a_t'] + params['b1'])
    x = jax.nn.relu(x @ params['w2_t'] + params['b2'])
    return x @ params['w3_t'] + params['b3']


# ---------------------------------- main --------------------------------------
if __name__ == "__main__":
    B, T = 2, 8
    state_size, action_size, hidden_size = 16, 4, HIDDEN

    key = jax.random.PRNGKey(0)
    k_s, k_a, k_p = jax.random.split(key, 3)

    state = jax.random.normal(k_s, (B, T, state_size), jnp.float32)
    action = jax.random.normal(k_a, (B, T, action_size), jnp.float32)
    params = init_params(k_p, state_size, action_size, hidden_size)
    kparams = pack_params(params, hidden_size)

    out = critic_forward(state, action, kparams)
    out = jax.block_until_ready(out)

    ref = critic_ref(state, action, params)
    assert out.shape == (B, 1)
    # bf16 matmul weights/activations (f32 accumulation) -> loosened tolerance.
    assert jnp.allclose(out, ref, rtol=2e-2, atol=2e-2), (out, ref)

    print("KERNEL_OK")
</pallas_src>

<mosaic_0001>
module attributes {stable_mosaic.version = 11 : i64} {
  func.func @critic_kernel(%arg0: memref<16x16xf32, #tpu.memory_space<vmem>>, %arg1: memref<2x4xf32, #tpu.memory_space<vmem>>, %arg2: memref<16x512xbf16, #tpu.memory_space<vmem>>, %arg3: memref<128x512xbf16, #tpu.memory_space<vmem>>, %arg4: memref<1x512xf32, #tpu.memory_space<vmem>>, %arg5: memref<128x256xbf16, #tpu.memory_space<vmem>>, %arg6: memref<4x256xbf16, #tpu.memory_space<vmem>>, %arg7: memref<1x256xf32, #tpu.memory_space<vmem>>, %arg8: memref<256x128xbf16, #tpu.memory_space<vmem>>, %arg9: memref<1x128xf32, #tpu.memory_space<vmem>>, %arg10: memref<1x128xf32, #tpu.memory_space<vmem>>, %arg11: memref<1x1xf32, #tpu.memory_space<vmem>>, %arg12: memref<2x1xf32, #tpu.memory_space<vmem>>) attributes {dimension_semantics = [], scalar_prefetch = 0 : i64, scratch_operands = 0 : i64, tpu.core_type = #tpu.core_type<tc>} {
    %c0 = arith.constant 0 : index
    %c0_0 = arith.constant 0 : index
    %0 = vector.load %arg3[%c0, %c0_0] : memref<128x512xbf16, #tpu.memory_space<vmem>>, vector<128x512xbf16>
    %c0_1 = arith.constant 0 : index
    %c0_2 = arith.constant 0 : index
    %1 = vector.load %arg4[%c0_1, %c0_2] : memref<1x512xf32, #tpu.memory_space<vmem>>, vector<1x512xf32>
    %c0_3 = arith.constant 0 : index
    %c0_4 = arith.constant 0 : index
    %2 = vector.load %arg0[%c0_3, %c0_4] : memref<16x16xf32, #tpu.memory_space<vmem>>, vector<16x16xf32>
    %3 = arith.truncf %2 : vector<16x16xf32> to vector<16x16xbf16>
    %c0_5 = arith.constant 0 : index
    %c0_6 = arith.constant 0 : index
    %4 = vector.load %arg2[%c0_5, %c0_6] : memref<16x512xbf16, #tpu.memory_space<vmem>>, vector<16x512xbf16>
    %cst = arith.constant dense<0.000000e+00> : vector<16x512xf32>
    %5 = tpu.matmul %3, %4, %cst {dimension_numbers = #tpu.dot_dimension_numbers<[1], [0], [0], [1], [0, 0, 1, 1], [], []>} : vector<16x16xbf16>, vector<16x512xbf16>, vector<16x512xf32> -> vector<16x512xf32>
    %6 = vector.broadcast %1 : vector<1x512xf32> to vector<16x512xf32>
    %7 = arith.addf %5, %6 : vector<16x512xf32>
    %cst_7 = arith.constant 0.000000e+00 : f32
    %8 = vector.broadcast %cst_7 : f32 to vector<2x128xf32>
    %cst_8 = arith.constant 0.000000e+00 : f32
    %9 = vector.broadcast %cst_8 : f32 to vector<2x128xf32>
    %10 = vector.extract_strided_slice %7 {offsets = [0, 0], sizes = [2, 512], strides = [1, 1]} : vector<16x512xf32> to vector<2x512xf32>
    %11 = arith.truncf %8 : vector<2x128xf32> to vector<2x128xbf16>
    %cst_9 = arith.constant dense<0.000000e+00> : vector<2x512xf32>
    %12 = tpu.matmul %11, %0, %cst_9 {dimension_numbers = #tpu.dot_dimension_numbers<[1], [0], [0], [1], [0, 0, 1, 1], [], []>} : vector<2x128xbf16>, vector<128x512xbf16>, vector<2x512xf32> -> vector<2x512xf32>
    %13 = arith.addf %10, %12 : vector<2x512xf32>
    %14 = vector.extract_strided_slice %13 {offsets = [0, 0], sizes = [2, 128], strides = [1, 1]} : vector<2x512xf32> to vector<2x128xf32>
    %15 = arith.negf %14 : vector<2x128xf32>
    %16 = math.exp %15 : vector<2x128xf32>
    %cst_10 = arith.constant 1.000000e+00 : f32
    %17 = vector.broadcast %cst_10 : f32 to vector<2x128xf32>
    %18 = arith.addf %17, %16 : vector<2x128xf32>
    %19 = arith.divf %17, %18 : vector<2x128xf32>
    %20 = vector.extract_strided_slice %13 {offsets = [0, 128], sizes = [2, 128], strides = [1, 1]} : vector<2x512xf32> to vector<2x128xf32>
    %21 = arith.negf %20 : vector<2x128xf32>
    %22 = math.exp %21 : vector<2x128xf32>
    %cst_11 = arith.constant 1.000000e+00 : f32
    %23 = vector.broadcast %cst_11 : f32 to vector<2x128xf32>
    %24 = arith.addf %23, %22 : vector<2x128xf32>
    %25 = arith.divf %23, %24 : vector<2x128xf32>
    %26 = vector.extract_strided_slice %13 {offsets = [0, 256], sizes = [2, 128], strides = [1, 1]} : vector<2x512xf32> to vector<2x128xf32>
    %27 = math.tanh %26 : vector<2x128xf32>
    %28 = vector.extract_strided_slice %13 {offsets = [0, 384], sizes = [2, 128], strides = [1, 1]} : vector<2x512xf32> to vector<2x128xf32>
    %29 = arith.negf %28 : vector<2x128xf32>
    %30 = math.exp %29 : vector<2x128xf32>
    %cst_12 = arith.constant 1.000000e+00 : f32
    %31 = vector.broadcast %cst_12 : f32 to vector<2x128xf32>
    %32 = arith.addf %31, %30 : vector<2x128xf32>
    %33 = arith.divf %31, %32 : vector<2x128xf32>
    %34 = arith.mulf %25, %9 : vector<2x128xf32>
    %35 = arith.mulf %19, %27 : vector<2x128xf32>
    %36 = arith.addf %34, %35 : vector<2x128xf32>
    %37 = math.tanh %36 : vector<2x128xf32>
    %38 = arith.mulf %33, %37 : vector<2x128xf32>
    %39 = vector.extract_strided_slice %7 {offsets = [2, 0], sizes = [2, 512], strides = [1, 1]} : vector<16x512xf32> to vector<2x512xf32>
    %40 = arith.truncf %38 : vector<2x128xf32> to vector<2x128xbf16>
    %cst_13 = arith.constant dense<0.000000e+00> : vector<2x512xf32>
    %41 = tpu.matmul %40, %0, %cst_13 {dimension_numbers = #tpu.dot_dimension_numbers<[1], [0], [0], [1], [0, 0, 1, 1], [], []>} : vector<2x128xbf16>, vector<128x512xbf16>, vector<2x512xf32> -> vector<2x512xf32>
    %42 = arith.addf %39, %41 : vector<2x512xf32>
    %43 = vector.extract_strided_slice %42 {offsets = [0, 0], sizes = [2, 128], strides = [1, 1]} : vector<2x512xf32> to vector<2x128xf32>
    %44 = arith.negf %43 : vector<2x128xf32>
    %45 = math.exp %44 : vector<2x128xf32>
    %cst_14 = arith.constant 1.000000e+00 : f32
    %46 = vector.broadcast %cst_14 : f32 to vector<2x128xf32>
    %47 = arith.addf %46, %45 : vector<2x128xf32>
    %48 = arith.divf %46, %47 : vector<2x128xf32>
    %49 = vector.extract_strided_slice %42 {offsets = [0, 128], sizes = [2, 128], strides = [1, 1]} : vector<2x512xf32> to vector<2x128xf32>
    %50 = arith.negf %49 : vector<2x128xf32>
    %51 = math.exp %50 : vector<2x128xf32>
    %cst_15 = arith.constant 1.000000e+00 : f32
    %52 = vector.broadcast %cst_15 : f32 to vector<2x128xf32>
    %53 = arith.addf %52, %51 : vector<2x128xf32>
    %54 = arith.divf %52, %53 : vector<2x128xf32>
    %55 = vector.extract_strided_slice %42 {offsets = [0, 256], sizes = [2, 128], strides = [1, 1]} : vector<2x512xf32> to vector<2x128xf32>
    %56 = math.tanh %55 : vector<2x128xf32>
    %57 = vector.extract_strided_slice %42 {offsets = [0, 384], sizes = [2, 128], strides = [1, 1]} : vector<2x512xf32> to vector<2x128xf32>
    %58 = arith.negf %57 : vector<2x128xf32>
    %59 = math.exp %58 : vector<2x128xf32>
    %cst_16 = arith.constant 1.000000e+00 : f32
    %60 = vector.broadcast %cst_16 : f32 to vector<2x128xf32>
    %61 = arith.addf %60, %59 : vector<2x128xf32>
    %62 = arith.divf %60, %61 : vector<2x128xf32>
    %63 = arith.mulf %54, %36 : vector<2x128xf32>
    %64 = arith.mulf %48, %56 : vector<2x128xf32>
    %65 = arith.addf %63, %64 : vector<2x128xf32>
    %66 = math.tanh %65 : vector<2x128xf32>
    %67 = arith.mulf %62, %66 : vector<2x128xf32>
    %68 = vector.extract_strided_slice %7 {offsets = [4, 0], sizes = [2, 512], strides = [1, 1]} : vector<16x512xf32> to vector<2x512xf32>
    %69 = arith.truncf %67 : vector<2x128xf32> to vector<2x128xbf16>
    %cst_17 = arith.constant dense<0.000000e+00> : vector<2x512xf32>
    %70 = tpu.matmul %69, %0, %cst_17 {dimension_numbers = #tpu.dot_dimension_numbers<[1], [0], [0], [1], [0, 0, 1, 1], [], []>} : vector<2x128xbf16>, vector<128x512xbf16>, vector<2x512xf32> -> vector<2x512xf32>
    %71 = arith.addf %68, %70 : vector<2x512xf32>
    %72 = vector.extract_strided_slice %71 {offsets = [0, 0], sizes = [2, 128], strides = [1, 1]} : vector<2x512xf32> to vector<2x128xf32>
    %73 = arith.negf %72 : vector<2x128xf32>
    %74 = math.exp %73 : vector<2x128xf32>
    %cst_18 = arith.constant 1.000000e+00 : f32
    %75 = vector.broadcast %cst_18 : f32 to vector<2x128xf32>
    %76 = arith.addf %75, %74 : vector<2x128xf32>
    %77 = arith.divf %75, %76 : vector<2x128xf32>
    %78 = vector.extract_strided_slice %71 {offsets = [0, 128], sizes = [2, 128], strides = [1, 1]} : vector<2x512xf32> to vector<2x128xf32>
    %79 = arith.negf %78 : vector<2x128xf32>
    %80 = math.exp %79 : vector<2x128xf32>
    %cst_19 = arith.constant 1.000000e+00 : f32
    %81 = vector.broadcast %cst_19 : f32 to vector<2x128xf32>
    %82 = arith.addf %81, %80 : vector<2x128xf32>
    %83 = arith.divf %81, %82 : vector<2x128xf32>
    %84 = vector.extract_strided_slice %71 {offsets = [0, 256], sizes = [2, 128], strides = [1, 1]} : vector<2x512xf32> to vector<2x128xf32>
    %85 = math.tanh %84 : vector<2x128xf32>
    %86 = vector.extract_strided_slice %71 {offsets = [0, 384], sizes = [2, 128], strides = [1, 1]} : vector<2x512xf32> to vector<2x128xf32>
    %87 = arith.negf %86 : vector<2x128xf32>
    %88 = math.exp %87 : vector<2x128xf32>
    %cst_20 = arith.constant 1.000000e+00 : f32
    %89 = vector.broadcast %cst_20 : f32 to vector<2x128xf32>
    %90 = arith.addf %89, %88 : vector<2x128xf32>
    %91 = arith.divf %89, %90 : vector<2x128xf32>
    %92 = arith.mulf %83, %65 : vector<2x128xf32>
    %93 = arith.mulf %77, %85 : vector<2x128xf32>
    %94 = arith.addf %92, %93 : vector<2x128xf32>
    %95 = math.tanh %94 : vector<2x128xf32>
    %96 = arith.mulf %91, %95 : vector<2x128xf32>
    %97 = vector.extract_strided_slice %7 {offsets = [6, 0], sizes = [2, 512], strides = [1, 1]} : vector<16x512xf32> to vector<2x512xf32>
    %98 = arith.truncf %96 : vector<2x128xf32> to vector<2x128xbf16>
    %cst_21 = arith.constant dense<0.000000e+00> : vector<2x512xf32>
    %99 = tpu.matmul %98, %0, %cst_21 {dimension_numbers = #tpu.dot_dimension_numbers<[1], [0], [0], [1], [0, 0, 1, 1], [], []>} : vector<2x128xbf16>, vector<128x512xbf16>, vector<2x512xf32> -> vector<2x512xf32>
    %100 = arith.addf %97, %99 : vector<2x512xf32>
    %101 = vector.extract_strided_slice %100 {offsets = [0, 0], sizes = [2, 128], strides = [1, 1]} : vector<2x512xf32> to vector<2x128xf32>
    %102 = arith.negf %101 : vector<2x128xf32>
    %103 = math.exp %102 : vector<2x128xf32>
    %cst_22 = arith.constant 1.000000e+00 : f32
    %104 = vector.broadcast %cst_22 : f32 to vector<2x128xf32>
    %105 = arith.addf %104, %103 : vector<2x128xf32>
    %106 = arith.divf %104, %105 : vector<2x128xf32>
    %107 = vector.extract_strided_slice %100 {offsets = [0, 128], sizes = [2, 128], strides = [1, 1]} : vector<2x512xf32> to vector<2x128xf32>
    %108 = arith.negf %107 : vector<2x128xf32>
    %109 = math.exp %108 : vector<2x128xf32>
    %cst_23 = arith.constant 1.000000e+00 : f32
    %110 = vector.broadcast %cst_23 : f32 to vector<2x128xf32>
    %111 = arith.addf %110, %109 : vector<2x128xf32>
    %112 = arith.divf %110, %111 : vector<2x128xf32>
    %113 = vector.extract_strided_slice %100 {offsets = [0, 256], sizes = [2, 128], strides = [1, 1]} : vector<2x512xf32> to vector<2x128xf32>
    %114 = math.tanh %113 : vector<2x128xf32>
    %115 = vector.extract_strided_slice %100 {offsets = [0, 384], sizes = [2, 128], strides = [1, 1]} : vector<2x512xf32> to vector<2x128xf32>
    %116 = arith.negf %115 : vector<2x128xf32>
    %117 = math.exp %116 : vector<2x128xf32>
    %cst_24 = arith.constant 1.000000e+00 : f32
    %118 = vector.broadcast %cst_24 : f32 to vector<2x128xf32>
    %119 = arith.addf %118, %117 : vector<2x128xf32>
    %120 = arith.divf %118, %119 : vector<2x128xf32>
    %121 = arith.mulf %112, %94 : vector<2x128xf32>
    %122 = arith.mulf %106, %114 : vector<2x128xf32>
    %123 = arith.addf %121, %122 : vector<2x128xf32>
    %124 = math.tanh %123 : vector<2x128xf32>
    %125 = arith.mulf %120, %124 : vector<2x128xf32>
    %126 = vector.extract_strided_slice %7 {offsets = [8, 0], sizes = [2, 512], strides = [1, 1]} : vector<16x512xf32> to vector<2x512xf32>
    %127 = arith.truncf %125 : vector<2x128xf32> to vector<2x128xbf16>
    %cst_25 = arith.constant dense<0.000000e+00> : vector<2x512xf32>
    %128 = tpu.matmul %127, %0, %cst_25 {dimension_numbers = #tpu.dot_dimension_numbers<[1], [0], [0], [1], [0, 0, 1, 1], [], []>} : vector<2x128xbf16>, vector<128x512xbf16>, vector<2x512xf32> -> vector<2x512xf32>
    %129 = arith.addf %126, %128 : vector<2x512xf32>
    %130 = vector.extract_strided_slice %129 {offsets = [0, 0], sizes = [2, 128], strides = [1, 1]} : vector<2x512xf32> to vector<2x128xf32>
    %131 = arith.negf %130 : vector<2x128xf32>
    %132 = math.exp %131 : vector<2x128xf32>
    %cst_26 = arith.constant 1.000000e+00 : f32
    %133 = vector.broadcast %cst_26 : f32 to vector<2x128xf32>
    %134 = arith.addf %133, %132 : vector<2x128xf32>
    %135 = arith.divf %133, %134 : vector<2x128xf32>
    %136 = vector.extract_strided_slice %129 {offsets = [0, 128], sizes = [2, 128], strides = [1, 1]} : vector<2x512xf32> to vector<2x128xf32>
    %137 = arith.negf %136 : vector<2x128xf32>
    %138 = math.exp %137 : vector<2x128xf32>
    %cst_27 = arith.constant 1.000000e+00 : f32
    %139 = vector.broadcast %cst_27 : f32 to vector<2x128xf32>
    %140 = arith.addf %139, %138 : vector<2x128xf32>
    %141 = arith.divf %139, %140 : vector<2x128xf32>
    %142 = vector.extract_strided_slice %129 {offsets = [0, 256], sizes = [2, 128], strides = [1, 1]} : vector<2x512xf32> to vector<2x128xf32>
    %143 = math.tanh %142 : vector<2x128xf32>
    %144 = vector.extract_strided_slice %129 {offsets = [0, 384], sizes = [2, 128], strides = [1, 1]} : vector<2x512xf32> to vector<2x128xf32>
    %145 = arith.negf %144 : vector<2x128xf32>
    %146 = math.exp %145 : vector<2x128xf32>
    %cst_28 = arith.constant 1.000000e+00 : f32
    %147 = vector.broadcast %cst_28 : f32 to vector<2x128xf32>
    %148 = arith.addf %147, %146 : vector<2x128xf32>
    %149 = arith.divf %147, %148 : vector<2x128xf32>
    %150 = arith.mulf %141, %123 : vector<2x128xf32>
    %151 = arith.mulf %135, %143 : vector<2x128xf32>
    %152 = arith.addf %150, %151 : vector<2x128xf32>
    %153 = math.tanh %152 : vector<2x128xf32>
    %154 = arith.mulf %149, %153 : vector<2x128xf32>
    %155 = vector.extract_strided_slice %7 {offsets = [10, 0], sizes = [2, 512], strides = [1, 1]} : vector<16x512xf32> to vector<2x512xf32>
    %156 = arith.truncf %154 : vector<2x128xf32> to vector<2x128xbf16>
    %cst_29 = arith.constant dense<0.000000e+00> : vector<2x512xf32>
    %157 = tpu.matmul %156, %0, %cst_29 {dimension_numbers = #tpu.dot_dimension_numbers<[1], [0], [0], [1], [0, 0, 1, 1], [], []>} : vector<2x128xbf16>, vector<128x512xbf16>, vector<2x512xf32> -> vector<2x512xf32>
    %158 = arith.addf %155, %157 : vector<2x512xf32>
    %159 = vector.extract_strided_slice %158 {offsets = [0, 0], sizes = [2, 128], strides = [1, 1]} : vector<2x512xf32> to vector<2x128xf32>
    %160 = arith.negf %159 : vector<2x128xf32>
    %161 = math.exp %160 : vector<2x128xf32>
    %cst_30 = arith.constant 1.000000e+00 : f32
    %162 = vector.broadcast %cst_30 : f32 to vector<2x128xf32>
    %163 = arith.addf %162, %161 : vector<2x128xf32>
    %164 = arith.divf %162, %163 : vector<2x128xf32>
    %165 = vector.extract_strided_slice %158 {offsets = [0, 128], sizes = [2, 128], strides = [1, 1]} : vector<2x512xf32> to vector<2x128xf32>
    %166 = arith.negf %165 : vector<2x128xf32>
    %167 = math.exp %166 : vector<2x128xf32>
    %cst_31 = arith.constant 1.000000e+00 : f32
    %168 = vector.broadcast %cst_31 : f32 to vector<2x128xf32>
    %169 = arith.addf %168, %167 : vector<2x128xf32>
    %170 = arith.divf %168, %169 : vector<2x128xf32>
    %171 = vector.extract_strided_slice %158 {offsets = [0, 256], sizes = [2, 128], strides = [1, 1]} : vector<2x512xf32> to vector<2x128xf32>
    %172 = math.tanh %171 : vector<2x128xf32>
    %173 = vector.extract_strided_slice %158 {offsets = [0, 384], sizes = [2, 128], strides = [1, 1]} : vector<2x512xf32> to vector<2x128xf32>
    %174 = arith.negf %173 : vector<2x128xf32>
    %175 = math.exp %174 : vector<2x128xf32>
    %cst_32 = arith.constant 1.000000e+00 : f32
    %176 = vector.broadcast %cst_32 : f32 to vector<2x128xf32>
    %177 = arith.addf %176, %175 : vector<2x128xf32>
    %178 = arith.divf %176, %177 : vector<2x128xf32>
    %179 = arith.mulf %170, %152 : vector<2x128xf32>
    %180 = arith.mulf %164, %172 : vector<2x128xf32>
    %181 = arith.addf %179, %180 : vector<2x128xf32>
    %182 = math.tanh %181 : vector<2x128xf32>
    %183 = arith.mulf %178, %182 : vector<2x128xf32>
    %184 = vector.extract_strided_slice %7 {offsets = [12, 0], sizes = [2, 512], strides = [1, 1]} : vector<16x512xf32> to vector<2x512xf32>
    %185 = arith.truncf %183 : vector<2x128xf32> to vector<2x128xbf16>
    %cst_33 = arith.constant dense<0.000000e+00> : vector<2x512xf32>
    %186 = tpu.matmul %185, %0, %cst_33 {dimension_numbers = #tpu.dot_dimension_numbers<[1], [0], [0], [1], [0, 0, 1, 1], [], []>} : vector<2x128xbf16>, vector<128x512xbf16>, vector<2x512xf32> -> vector<2x512xf32>
    %187 = arith.addf %184, %186 : vector<2x512xf32>
    %188 = vector.extract_strided_slice %187 {offsets = [0, 0], sizes = [2, 128], strides = [1, 1]} : vector<2x512xf32> to vector<2x128xf32>
    %189 = arith.negf %188 : vector<2x128xf32>
    %190 = math.exp %189 : vector<2x128xf32>
    %cst_34 = arith.constant 1.000000e+00 : f32
    %191 = vector.broadcast %cst_34 : f32 to vector<2x128xf32>
    %192 = arith.addf %191, %190 : vector<2x128xf32>
    %193 = arith.divf %191, %192 : vector<2x128xf32>
    %194 = vector.extract_strided_slice %187 {offsets = [0, 128], sizes = [2, 128], strides = [1, 1]} : vector<2x512xf32> to vector<2x128xf32>
    %195 = arith.negf %194 : vector<2x128xf32>
    %196 = math.exp %195 : vector<2x128xf32>
    %cst_35 = arith.constant 1.000000e+00 : f32
    %197 = vector.broadcast %cst_35 : f32 to vector<2x128xf32>
    %198 = arith.addf %197, %196 : vector<2x128xf32>
    %199 = arith.divf %197, %198 : vector<2x128xf32>
    %200 = vector.extract_strided_slice %187 {offsets = [0, 256], sizes = [2, 128], strides = [1, 1]} : vector<2x512xf32> to vector<2x128xf32>
    %201 = math.tanh %200 : vector<2x128xf32>
    %202 = vector.extract_strided_slice %187 {offsets = [0, 384], sizes = [2, 128], strides = [1, 1]} : vector<2x512xf32> to vector<2x128xf32>
    %203 = arith.negf %202 : vector<2x128xf32>
    %204 = math.exp %203 : vector<2x128xf32>
    %cst_36 = arith.constant 1.000000e+00 : f32
    %205 = vector.broadcast %cst_36 : f32 to vector<2x128xf32>
    %206 = arith.addf %205, %204 : vector<2x128xf32>
    %207 = arith.divf %205, %206 : vector<2x128xf32>
    %208 = arith.mulf %199, %181 : vector<2x128xf32>
    %209 = arith.mulf %193, %201 : vector<2x128xf32>
    %210 = arith.addf %208, %209 : vector<2x128xf32>
    %211 = math.tanh %210 : vector<2x128xf32>
    %212 = arith.mulf %207, %211 : vector<2x128xf32>
    %213 = vector.extract_strided_slice %7 {offsets = [14, 0], sizes = [2, 512], strides = [1, 1]} : vector<16x512xf32> to vector<2x512xf32>
    %214 = arith.truncf %212 : vector<2x128xf32> to vector<2x128xbf16>
    %cst_37 = arith.constant dense<0.000000e+00> : vector<2x512xf32>
    %215 = tpu.matmul %214, %0, %cst_37 {dimension_numbers = #tpu.dot_dimension_numbers<[1], [0], [0], [1], [0, 0, 1, 1], [], []>} : vector<2x128xbf16>, vector<128x512xbf16>, vector<2x512xf32> -> vector<2x512xf32>
    %216 = arith.addf %213, %215 : vector<2x512xf32>
    %217 = vector.extract_strided_slice %216 {offsets = [0, 0], sizes = [2, 128], strides = [1, 1]} : vector<2x512xf32> to vector<2x128xf32>
    %218 = arith.negf %217 : vector<2x128xf32>
    %219 = math.exp %218 : vector<2x128xf32>
    %cst_38 = arith.constant 1.000000e+00 : f32
    %220 = vector.broadcast %cst_38 : f32 to vector<2x128xf32>
    %221 = arith.addf %220, %219 : vector<2x128xf32>
    %222 = arith.divf %220, %221 : vector<2x128xf32>
    %223 = vector.extract_strided_slice %216 {offsets = [0, 128], sizes = [2, 128], strides = [1, 1]} : vector<2x512xf32> to vector<2x128xf32>
    %224 = arith.negf %223 : vector<2x128xf32>
    %225 = math.exp %224 : vector<2x128xf32>
    %cst_39 = arith.constant 1.000000e+00 : f32
    %226 = vector.broadcast %cst_39 : f32 to vector<2x128xf32>
    %227 = arith.addf %226, %225 : vector<2x128xf32>
    %228 = arith.divf %226, %227 : vector<2x128xf32>
    %229 = vector.extract_strided_slice %216 {offsets = [0, 256], sizes = [2, 128], strides = [1, 1]} : vector<2x512xf32> to vector<2x128xf32>
    %230 = math.tanh %229 : vector<2x128xf32>
    %231 = vector.extract_strided_slice %216 {offsets = [0, 384], sizes = [2, 128], strides = [1, 1]} : vector<2x512xf32> to vector<2x128xf32>
    %232 = arith.negf %231 : vector<2x128xf32>
    %233 = math.exp %232 : vector<2x128xf32>
    %cst_40 = arith.constant 1.000000e+00 : f32
    %234 = vector.broadcast %cst_40 : f32 to vector<2x128xf32>
    %235 = arith.addf %234, %233 : vector<2x128xf32>
    %236 = arith.divf %234, %235 : vector<2x128xf32>
    %237 = arith.mulf %228, %210 : vector<2x128xf32>
    %238 = arith.mulf %222, %230 : vector<2x128xf32>
    %239 = arith.addf %237, %238 : vector<2x128xf32>
    %240 = math.tanh %239 : vector<2x128xf32>
    %241 = arith.mulf %236, %240 : vector<2x128xf32>
    %c0_41 = arith.constant 0 : index
    %c0_42 = arith.constant 0 : index
    %242 = vector.load %arg1[%c0_41, %c0_42] : memref<2x4xf32, #tpu.memory_space<vmem>>, vector<2x4xf32>
    %243 = arith.truncf %241 : vector<2x128xf32> to vector<2x128xbf16>
    %c0_43 = arith.constant 0 : index
    %c0_44 = arith.constant 0 : index
    %244 = vector.load %arg5[%c0_43, %c0_44] : memref<128x256xbf16, #tpu.memory_space<vmem>>, vector<128x256xbf16>
    %cst_45 = arith.constant dense<0.000000e+00> : vector<2x256xf32>
    %245 = tpu.matmul %243, %244, %cst_45 {dimension_numbers = #tpu.dot_dimension_numbers<[1], [0], [0], [1], [0, 0, 1, 1], [], []>} : vector<2x128xbf16>, vector<128x256xbf16>, vector<2x256xf32> -> vector<2x256xf32>
    %246 = arith.truncf %242 : vector<2x4xf32> to vector<2x4xbf16>
    %c0_46 = arith.constant 0 : index
    %c0_47 = arith.constant 0 : index
    %247 = vector.load %arg6[%c0_46, %c0_47] : memref<4x256xbf16, #tpu.memory_space<vmem>>, vector<4x256xbf16>
    %cst_48 = arith.constant dense<0.000000e+00> : vector<2x256xf32>
    %248 = tpu.matmul %246, %247, %cst_48 {dimension_numbers = #tpu.dot_dimension_numbers<[1], [0], [0], [1], [0, 0, 1, 1], [], []>} : vector<2x4xbf16>, vector<4x256xbf16>, vector<2x256xf32> -> vector<2x256xf32>
    %249 = arith.addf %245, %248 : vector<2x256xf32>
    %c0_49 = arith.constant 0 : index
    %c0_50 = arith.constant 0 : index
    %250 = vector.load %arg7[%c0_49, %c0_50] : memref<1x256xf32, #tpu.memory_space<vmem>>, vector<1x256xf32>
    %251 = vector.broadcast %250 : vector<1x256xf32> to vector<2x256xf32>
    %252 = arith.addf %249, %251 : vector<2x256xf32>
    %cst_51 = arith.constant 0.000000e+00 : f32
    %253 = vector.broadcast %cst_51 : f32 to vector<2x256xf32>
    %254 = arith.maximumf %252, %253 : vector<2x256xf32>
    %255 = arith.truncf %254 : vector<2x256xf32> to vector<2x256xbf16>
    %c0_52 = arith.constant 0 : index
    %c0_53 = arith.constant 0 : index
    %256 = vector.load %arg8[%c0_52, %c0_53] : memref<256x128xbf16, #tpu.memory_space<vmem>>, vector<256x128xbf16>
    %cst_54 = arith.constant dense<0.000000e+00> : vector<2x128xf32>
    %257 = tpu.matmul %255, %256, %cst_54 {dimension_numbers = #tpu.dot_dimension_numbers<[1], [0], [0], [1], [0, 0, 1, 1], [], []>} : vector<2x256xbf16>, vector<256x128xbf16>, vector<2x128xf32> -> vector<2x128xf32>
    %c0_55 = arith.constant 0 : index
    %c0_56 = arith.constant 0 : index
    %258 = vector.load %arg9[%c0_55, %c0_56] : memref<1x128xf32, #tpu.memory_space<vmem>>, vector<1x128xf32>
    %259 = vector.broadcast %258 : vector<1x128xf32> to vector<2x128xf32>
    %260 = arith.addf %257, %259 : vector<2x128xf32>
    %cst_57 = arith.constant 0.000000e+00 : f32
    %261 = vector.broadcast %cst_57 : f32 to vector<2x128xf32>
    %262 = arith.maximumf %260, %261 : vector<2x128xf32>
    %c0_58 = arith.constant 0 : index
    %c0_59 = arith.constant 0 : index
    %263 = vector.load %arg10[%c0_58, %c0_59] : memref<1x128xf32, #tpu.memory_space<vmem>>, vector<1x128xf32>
    %264 = vector.broadcast %263 : vector<1x128xf32> to vector<2x128xf32>
    %265 = arith.mulf %262, %264 : vector<2x128xf32>
    %cst_60 = arith.constant dense<0.000000e+00> : vector<2xf32>
    %266 = vector.multi_reduction <add>, %265, %cst_60 [1] : vector<2x128xf32> to vector<2xf32>
    %267 = vector.shape_cast %266 : vector<2xf32> to vector<2x1xf32>
    %c0_61 = arith.constant 0 : index
    %c0_62 = arith.constant 0 : index
    %268 = vector.load %arg11[%c0_61, %c0_62] : memref<1x1xf32, #tpu.memory_space<vmem>>, vector<1x1xf32>
    %269 = vector.broadcast %268 : vector<1x1xf32> to vector<2x1xf32>
    %270 = arith.addf %267, %269 : vector<2x1xf32>
    %c0_63 = arith.constant 0 : index
    %c0_64 = arith.constant 0 : index
    %271 = vector.load %arg12[%c0_63, %c0_64] : memref<2x1xf32, #tpu.memory_space<vmem>>, vector<2x1xf32>
    tpu.vector_store %arg12[%c0_63, %c0_64], %270 {strides = array<i32>} : memref<2x1xf32, #tpu.memory_space<vmem>>, vector<2x1xf32>,
    return
  }
}

</mosaic_0001>

<llo_original>
// kernel: critic_forward.1
$region0: #{critic_forward.1}
  #allocation0 [shape = 'u32[]', space=smem, size = 0x4, offset = 0x4, fixed_abs, tag = 'smem constant byte address 0x4 - core index']
  #allocation1 [shape = 'u32[72,128]{1,0:T(1,128)}', space=vmem, size = 0x9000, scoped, tag = 'internal scratch']
  #allocation2 [shape = 'f32[1,1]{1,0:T(1,128)S(1)}', space=vmem, size = 0x200, scoped, tag = 'scoped memory for critic_forward.1']
  %s0 = inlined_call_operand.vmem [shape: f32[16,16], index: 0, kind: input, shape index: {}]
  %s1 = inlined_call_operand.vmem [shape: f32[2,4], index: 1, kind: input, shape index: {}]
  %s2 = inlined_call_operand.vmem [shape: bf16[16,512], index: 2, kind: input, shape index: {}]
  %s3 = inlined_call_operand.hbm [shape: bf16[128,512], index: 3, kind: input, shape index: {}]
  %s4 = inlined_call_operand.vmem [shape: f32[1,512], index: 4, kind: input, shape index: {}]
  %s5 = inlined_call_operand.hbm [shape: bf16[128,256], index: 5, kind: input, shape index: {}]
  %s6 = inlined_call_operand.vmem [shape: bf16[4,256], index: 6, kind: input, shape index: {}]
  %s7 = inlined_call_operand.vmem [shape: f32[1,256], index: 7, kind: input, shape index: {}]
  %s8 = inlined_call_operand.hbm [shape: bf16[256,128], index: 8, kind: input, shape index: {}]
  %s9 = inlined_call_operand.vmem [shape: f32[1,128], index: 9, kind: input, shape index: {}]
  %s10 = inlined_call_operand.vmem [shape: f32[1,128], index: 10, kind: input, shape index: {}]
  %s11 = inlined_call_operand.<no memory space> [shape: f32[1,1], index: 11, kind: input, shape index: {}]
  %s12 = inlined_call_operand.vmem [shape: f32[2,1], index: 12, kind: output, shape index: {}]
  %s13 = sld [smem:[#allocation0]]
  $region70: #{critic_forward.1} parent=0
    _
  %s15 = ssub.s32 1, %s13
  %s16 = scalar_select 0, %s15, %s13
  %v17 = vstv %s11
  %18 = vst [vmem:[#allocation2] sm:$0x1] %v17
  $region1: #{critic_forward.1} parent=0
    #allocation3 [shape = 'u8[131072]{0}', space=vmem, size = 0x20000, scoped, tag = 'input window, operand 3, single buffered']
    #allocation4 [shape = 's32[1]{0}', space=sflag, size = 0x4, scoped, tag = 'scoped memory for critic_forward.1']
    #allocation5 [shape = 'u8[65536]{0}', space=vmem, size = 0x10000, scoped, tag = 'input window, operand 5, single buffered']
    #allocation6 [shape = 's32[1]{0}', space=sflag, size = 0x4, scoped, tag = 'scoped memory for critic_forward.1']
    #allocation7 [shape = 'u8[65536]{0}', space=vmem, size = 0x10000, scoped, tag = 'input window, operand 8, single buffered']
    %19 = vsyncpa [#allocation4], 0
    %20 = vsyncpa [#allocation6], 0
    // Predicated region
    $region2: #{critic_forward.1} parent=1 // pred_check
      _
    $region3: #{critic_forward.1} parent=1 // pred_check_branch
      %22 = sbr.rel (0) target = $region5
    $region4: #{critic_forward.1} parent=1 // pred_region
      _
    $region5: #{critic_forward.1} parent=1 // pred_fallthru
      _
    // Predicated region
    $region6: #{critic_forward.1} parent=1 // pred_check
      _
    $region7: #{critic_forward.1} parent=1 // pred_check_branch
      %24 = sbr.rel (0) target = $region9
    $region8: #{critic_forward.1} parent=1 // pred_region
      _
    $region9: #{critic_forward.1} parent=1 // pred_fallthru
      _
    // Predicated region
    $region10: #{critic_forward.1} parent=1 // pred_check
      _
    $region11: #{critic_forward.1} parent=1 // pred_check_branch
      %26 = sbr.rel (0) target = $region13
    $region12: #{critic_forward.1} parent=1 // pred_region
      _
    $region13: #{critic_forward.1} parent=1 // pred_fallthru
      _
    // Predicated region
    $region14: #{critic_forward.1} parent=1 // pred_check
      _
    $region15: #{critic_forward.1} parent=1 // pred_check_branch
      %28 = sbr.rel (0) target = $region17
    $region16: #{critic_forward.1} parent=1 // pred_region
      %30 = vsyncadd [#allocation4], 0
      %s31 = sshll.u32 %s3, 4
      %s32 = int_to_ptr.hbm [resolvable:$true] %s31
      %s33 = sshll.u32 [#allocation3], 4
      %s34 = int_to_ptr.vmem [resolvable:$true] %s33
      %39 = dma.hbm_to_vmem [thread:$0]  %s32, 4096, %s34, [#allocation4], 256, 256, 16
    $region17: #{critic_forward.1} parent=1 // pred_fallthru
      _
    // Predicated region
    $region18: #{critic_forward.1} parent=1 // pred_check
      _
    $region19: #{critic_forward.1} parent=1 // pred_check_branch
      %41 = sbr.rel (0) target = $region21
    $region20: #{critic_forward.1} parent=1 // pred_region
      _
    $region21: #{critic_forward.1} parent=1 // pred_fallthru
      _
    // Predicated region
    $region22: #{critic_forward.1} parent=1 // pred_check
      _
    $region23: #{critic_forward.1} parent=1 // pred_check_branch
      %43 = sbr.rel (0) target = $region25
    $region24: #{critic_forward.1} parent=1 // pred_region
      %45 = vsyncadd [#allocation6], 0
      %s46 = sshll.u32 %s5, 4
      %s47 = int_to_ptr.hbm [resolvable:$true] %s46
      %s48 = sshll.u32 [#allocation5], 4
      %s49 = int_to_ptr.vmem [resolvable:$true] %s48
      %54 = dma.hbm_to_vmem [thread:$0]  %s47, 2048, %s49, [#allocation6], 128, 128, 8
    $region25: #{critic_forward.1} parent=1 // pred_fallthru
      _
    // Predicated region
    $region26: #{critic_forward.1} parent=1 // pred_check
      _
    $region27: #{critic_forward.1} parent=1 // pred_check_branch
      %56 = sbr.rel (0) target = $region29
    $region28: #{critic_forward.1} parent=1 // pred_region
      _
    $region29: #{critic_forward.1} parent=1 // pred_fallthru
      _
    // Predicated region
    $region30: #{critic_forward.1} parent=1 // pred_check
      _
    $region31: #{critic_forward.1} parent=1 // pred_check_branch
      %58 = sbr.rel (0) target = $region33
    $region32: #{critic_forward.1} parent=1 // pred_region
      _
    $region33: #{critic_forward.1} parent=1 // pred_fallthru
      _
    // Predicated region
    $region34: #{critic_forward.1} parent=1 // pred_check
      _
    $region35: #{critic_forward.1} parent=1 // pred_check_branch
      %60 = sbr.rel (0) target = $region37
    $region36: #{critic_forward.1} parent=1 // pred_region
      %62 = vsyncadd [#allocation6], 0
      %s63 = sshll.u32 %s8, 4
      %s64 = int_to_ptr.hbm [resolvable:$true] %s63
      %s65 = sshll.u32 [#allocation7], 4
      %s66 = int_to_ptr.vmem [resolvable:$true] %s65
      %71 = dma.hbm_to_vmem [thread:$0]  %s64, 2048, %s66, [#allocation6], 64, 64, 4
    $region37: #{critic_forward.1} parent=1 // pred_fallthru
      _
    // Predicated region
    $region38: #{critic_forward.1} parent=1 // pred_check
      _
    $region39: #{critic_forward.1} parent=1 // pred_check_branch
      %73 = sbr.rel (0) target = $region41
    $region40: #{critic_forward.1} parent=1 // pred_region
      _
    $region41: #{critic_forward.1} parent=1 // pred_fallthru
      _
    // Predicated region
    $region42: #{critic_forward.1} parent=1 // pred_check
      _
    $region43: #{critic_forward.1} parent=1 // pred_check_branch
      %75 = sbr.rel (0) target = $region45
    $region44: #{critic_forward.1} parent=1 // pred_region
      _
    $region45: #{critic_forward.1} parent=1 // pred_fallthru
      _
    // Predicated region
    $region46: #{critic_forward.1} parent=1 // pred_check
      _
    $region47: #{critic_forward.1} parent=1 // pred_check_branch
      %77 = sbr.rel (0) target = $region49
    $region48: #{critic_forward.1} parent=1 // pred_region
      _
    $region49: #{critic_forward.1} parent=1 // pred_fallthru
      _
    // Predicated region
    $region50: #{critic_forward.1} parent=1 // pred_check
      _
    $region51: #{critic_forward.1} parent=1 // pred_check_branch
      %79 = sbr.rel (0) target = $region53
    $region52: #{critic_forward.1} parent=1 // pred_region
      %81 = dma.done [#allocation4], 4096
    $region53: #{critic_forward.1} parent=1 // pred_fallthru
      _
    // Predicated region
    $region54: #{critic_forward.1} parent=1 // pred_check
      _
    $region55: #{critic_forward.1} parent=1 // pred_check_branch
      %83 = sbr.rel (0) target = $region57
    $region56: #{critic_forward.1} parent=1 // pred_region
      %85 = dma.done [#allocation6], 2048
    $region57: #{critic_forward.1} parent=1 // pred_fallthru
      _
    // Predicated region
    $region58: #{critic_forward.1} parent=1 // pred_check
      _
    $region59: #{critic_forward.1} parent=1 // pred_check_branch
      %87 = sbr.rel (0) target = $region61
    $region60: #{critic_forward.1} parent=1 // pred_region
      %89 = dma.done [#allocation6], 2048
    $region61: #{critic_forward.1} parent=1 // pred_fallthru
      _
    %v91 = vld [vmem:[#allocation3] sm:$0xff]
    %v92 = vld [vmem:[#allocation3 + $0x8] sm:$0xff]
    %v93 = vld [vmem:[#allocation3 + $0x10] sm:$0xff]
    %v94 = vld [vmem:[#allocation3 + $0x18] sm:$0xff]
    %v95 = vld [vmem:[#allocation3 + $0x20] sm:$0xff]
    %v96 = vld [vmem:[#allocation3 + $0x28] sm:$0xff]
    %v97 = vld [vmem:[#allocation3 + $0x30] sm:$0xff]
    %v98 = vld [vmem:[#allocation3 + $0x38] sm:$0xff]
    %v99 = vld [vmem:[#allocation3 + $0x40] sm:$0xff]
    %v100 = vld [vmem:[#allocation3 + $0x48] sm:$0xff]
    %v101 = vld [vmem:[#allocation3 + $0x50] sm:$0xff]
    %v102 = vld [vmem:[#allocation3 + $0x58] sm:$0xff]
    %v103 = vld [vmem:[#allocation3 + $0x60] sm:$0xff]
    %v104 = vld [vmem:[#allocation3 + $0x68] sm:$0xff]
    %v105 = vld [vmem:[#allocation3 + $0x70] sm:$0xff]
    %v106 = vld [vmem:[#allocation3 + $0x78] sm:$0xff]
    %v107 = vld [vmem:[#allocation3 + $0x80] sm:$0xff]
    %v108 = vld [vmem:[#allocation3 + $0x88] sm:$0xff]
    %v109 = vld [vmem:[#allocation3 + $0x90] sm:$0xff]
    %v110 = vld [vmem:[#allocation3 + $0x98] sm:$0xff]
    %v111 = vld [vmem:[#allocation3 + $0xa0] sm:$0xff]
    %v112 = vld [vmem:[#allocation3 + $0xa8] sm:$0xff]
    %v113 = vld [vmem:[#allocation3 + $0xb0] sm:$0xff]
    %v114 = vld [vmem:[#allocation3 + $0xb8] sm:$0xff]
    %v115 = vld [vmem:[#allocation3 + $0xc0] sm:$0xff]
    %v116 = vld [vmem:[#allocation3 + $0xc8] sm:$0xff]
    %v117 = vld [vmem:[#allocation3 + $0xd0] sm:$0xff]
    %v118 = vld [vmem:[#allocation3 + $0xd8] sm:$0xff]
    %v119 = vld [vmem:[#allocation3 + $0xe0] sm:$0xff]
    %v120 = vld [vmem:[#allocation3 + $0xe8] sm:$0xff]
    %v121 = vld [vmem:[#allocation3 + $0xf0] sm:$0xff]
    %v122 = vld [vmem:[#allocation3 + $0xf8] sm:$0xff]
    %v123 = vld [vmem:[%s4] sm:$0xf]
    %v124 = vld [vmem:[%s0] sm:$0xff]
    %v125 = vld [vmem:[%s0 + $0x8] sm:$0xff]
    %v126 = vpack.c.bf16 %v125, %v124
    %v127 = vld [vmem:[%s2] sm:$0xff]
    %v128 = vld [vmem:[%s2 + $0x8] sm:$0xff]
    %v129 = vld [vmem:[%s2 + $0x10] sm:$0xff]
    %v130 = vld [vmem:[%s2 + $0x18] sm:$0xff]
    %v132 = vperm.slane %v123, 0
    %v133 = vperm.slane %v123, 1
    %v134 = vperm.slane %v123, 2
    %v135 = vperm.slane %v123, 3
    %v144 = vunpack.c.l.b16 %v127
    %v145 = vunpack.c.h.b16 %v127
    %v146 = vunpack.c.l.b16 %v128
    %v147 = vunpack.c.h.b16 %v128
    %v148 = vunpack.c.l.b16 %v129
    %v149 = vunpack.c.h.b16 %v129
    %v150 = vunpack.c.l.b16 %v130
    %v151 = vunpack.c.h.b16 %v130
    %v152 = vpack.c.b16 %v148, %v144
    %v153 = vpack.c.b16 %v149, %v145
    %v154 = vpack.c.b16 %v150, %v146
    %v155 = vpack.c.b16 %v151, %v147
    %vm160 = vcmask 130048
    %v162 = vsel %vm160, %v126, 0
    %164 = vmatpush.bf16.msra.mxu0 0
    %165 = vmatpush.bf16.msra.mxu0 0
    %166 = vmatpush.bf16.msra.mxu0 0
    %167 = vmatpush.bf16.msra.mxu0 0
    %168 = vmatpush.bf16.msra.mxu0 0
    %169 = vmatpush.bf16.msra.mxu0 0
    %170 = vmatpush.bf16.msra.mxu0 0
    %171 = vmatpush.bf16.msra.mxu0 %v152
    %172 = vmatmul.bf16.gmra.mxu0 %v162
    %v173 = vpop.f32.mrf.mxu0
    %v174 = vadd.f32 %v132, %v173
    %v175 = vpop.f32.mrf.mxu0
    %v176 = vadd.f32 %v132, %v175
    %177 = vdwg.mxu0
    %178 = vmatpush.bf16.msra.mxu0 0
    %179 = vmatpush.bf16.msra.mxu0 0
    %180 = vmatpush.bf16.msra.mxu0 0
    %181 = vmatpush.bf16.msra.mxu0 0
    %182 = vmatpush.bf16.msra.mxu0 0
    %183 = vmatpush.bf16.msra.mxu0 0
    %184 = vmatpush.bf16.msra.mxu0 0
    %185 = vmatpush.bf16.msra.mxu0 %v153
    %186 = vmatmul.bf16.gmra.mxu0 %v162
    %v187 = vpop.f32.mrf.mxu0
    %v188 = vadd.f32 %v133, %v187
    %v189 = vpop.f32.mrf.mxu0
    %v190 = vadd.f32 %v133, %v189
    %191 = vdwg.mxu0
    %192 = vmatpush.bf16.msra.mxu0 0
    %193 = vmatpush.bf16.msra.mxu0 0
    %194 = vmatpush.bf16.msra.mxu0 0
    %195 = vmatpush.bf16.msra.mxu0 0
    %196 = vmatpush.bf16.msra.mxu0 0
    %197 = vmatpush.bf16.msra.mxu0 0
    %198 = vmatpush.bf16.msra.mxu0 0
    %199 = vmatpush.bf16.msra.mxu0 %v154
    %200 = vmatmul.bf16.gmra.mxu0 %v162
    %v201 = vpop.f32.mrf.mxu0
    %v202 = vadd.f32 %v134, %v201
    %v203 = vpop.f32.mrf.mxu0
    %v204 = vadd.f32 %v134, %v203
    %205 = vdwg.mxu0
    %206 = vmatpush.bf16.msra.mxu0 0
    %207 = vmatpush.bf16.msra.mxu0 0
    %208 = vmatpush.bf16.msra.mxu0 0
    %209 = vmatpush.bf16.msra.mxu0 0
    %210 = vmatpush.bf16.msra.mxu0 0
    %211 = vmatpush.bf16.msra.mxu0 0
    %212 = vmatpush.bf16.msra.mxu0 0
    %213 = vmatpush.bf16.msra.mxu0 %v155
    %214 = vmatmul.bf16.gmra.mxu0 %v162
    %v215 = vpop.f32.mrf.mxu0
    %v216 = vadd.f32 %v135, %v215
    %v217 = vpop.f32.mrf.mxu0
    %v218 = vadd.f32 %v135, %v217
    %219 = vdwg.mxu0
    %v252 = vunpack.c.l.b16 %v91
    %v253 = vunpack.c.h.b16 %v91
    %v254 = vunpack.c.l.b16 %v92
    %v255 = vunpack.c.h.b16 %v92
    %v256 = vunpack.c.l.b16 %v93
    %v257 = vunpack.c.h.b16 %v93
    %v258 = vunpack.c.l.b16 %v94
    %v259 = vunpack.c.h.b16 %v94
    %v260 = vunpack.c.l.b16 %v95
    %v261 = vunpack.c.h.b16 %v95
    %v262 = vunpack.c.l.b16 %v96
    %v263 = vunpack.c.h.b16 %v96
    %v264 = vunpack.c.l.b16 %v97
    %v265 = vunpack.c.h.b16 %v97
    %v266 = vunpack.c.l.b16 %v98
    %v267 = vunpack.c.h.b16 %v98
    %v268 = vunpack.c.l.b16 %v99
    %v269 = vunpack.c.h.b16 %v99
    %v270 = vunpack.c.l.b16 %v100
    %v271 = vunpack.c.h.b16 %v100
    %v272 = vunpack.c.l.b16 %v101
    %v273 = vunpack.c.h.b16 %v101
    %v274 = vunpack.c.l.b16 %v102
    %v275 = vunpack.c.h.b16 %v102
    %v276 = vunpack.c.l.b16 %v103
    %v277 = vunpack.c.h.b16 %v103
    %v278 = vunpack.c.l.b16 %v104
    %v279 = vunpack.c.h.b16 %v104
    %v280 = vunpack.c.l.b16 %v105
    %v281 = vunpack.c.h.b16 %v105
    %v282 = vunpack.c.l.b16 %v106
    %v283 = vunpack.c.h.b16 %v106
    %v284 = vunpack.c.l.b16 %v107
    %v285 = vunpack.c.h.b16 %v107
    %v286 = vunpack.c.l.b16 %v108
    %v287 = vunpack.c.h.b16 %v108
    %v288 = vunpack.c.l.b16 %v109
    %v289 = vunpack.c.h.b16 %v109
    %v290 = vunpack.c.l.b16 %v110
    %v291 = vunpack.c.h.b16 %v110
    %v292 = vunpack.c.l.b16 %v111
    %v293 = vunpack.c.h.b16 %v111
    %v294 = vunpack.c.l.b16 %v112
    %v295 = vunpack.c.h.b16 %v112
    %v296 = vunpack.c.l.b16 %v113
    %v297 = vunpack.c.h.b16 %v113
    %v298 = vunpack.c.l.b16 %v114
    %v299 = vunpack.c.h.b16 %v114
    %v300 = vunpack.c.l.b16 %v115
    %v301 = vunpack.c.h.b16 %v115
    %v302 = vunpack.c.l.b16 %v116
    %v303 = vunpack.c.h.b16 %v116
    %v304 = vunpack.c.l.b16 %v117
    %v305 = vunpack.c.h.b16 %v117
    %v306 = vunpack.c.l.b16 %v118
    %v307 = vunpack.c.h.b16 %v118
    %v308 = vunpack.c.l.b16 %v119
    %v309 = vunpack.c.h.b16 %v119
    %v310 = vunpack.c.l.b16 %v120
    %v311 = vunpack.c.h.b16 %v120
    %v312 = vunpack.c.l.b16 %v121
    %v313 = vunpack.c.h.b16 %v121
    %v314 = vunpack.c.l.b16 %v122
    %v315 = vunpack.c.h.b16 %v122
    %v316 = vpack.c.b16 %v256, %v252
    %v317 = vpack.c.b16 %v257, %v253
    %v318 = vpack.c.b16 %v258, %v254
    %v319 = vpack.c.b16 %v259, %v255
    %v320 = vpack.c.b16 %v264, %v260
    %v321 = vpack.c.b16 %v265, %v261
    %v322 = vpack.c.b16 %v266, %v262
    %v323 = vpack.c.b16 %v267, %v263
    %v324 = vpack.c.b16 %v272, %v268
    %v325 = vpack.c.b16 %v273, %v269
    %v326 = vpack.c.b16 %v274, %v270
    %v327 = vpack.c.b16 %v275, %v271
    %v328 = vpack.c.b16 %v280, %v276
    %v329 = vpack.c.b16 %v281, %v277
    %v330 = vpack.c.b16 %v282, %v278
    %v331 = vpack.c.b16 %v283, %v279
    %v332 = vpack.c.b16 %v288, %v284
    %v333 = vpack.c.b16 %v289, %v285
    %v334 = vpack.c.b16 %v290, %v286
    %v335 = vpack.c.b16 %v291, %v287
    %v336 = vpack.c.b16 %v296, %v292
    %v337 = vpack.c.b16 %v297, %v293
    %v338 = vpack.c.b16 %v298, %v294
    %v339 = vpack.c.b16 %v299, %v295
    %v340 = vpack.c.b16 %v304, %v300
    %v341 = vpack.c.b16 %v305, %v301
    %v342 = vpack.c.b16 %v306, %v302
    %v343 = vpack.c.b16 %v307, %v303
    %v344 = vpack.c.b16 %v312, %v308
    %v345 = vpack.c.b16 %v313, %v309
    %v346 = vpack.c.b16 %v314, %v310
    %v347 = vpack.c.b16 %v315, %v311
    %380 = vmatpush.bf16.msra.mxu0 %v344
    %381 = vmatpush.bf16.msra.mxu0 %v340
    %382 = vmatpush.bf16.msra.mxu0 %v336
    %383 = vmatpush.bf16.msra.mxu0 %v332
    %384 = vmatpush.bf16.msra.mxu0 %v328
    %385 = vmatpush.bf16.msra.mxu0 %v324
    %386 = vmatpush.bf16.msra.mxu0 %v320
    %387 = vmatpush.bf16.msra.mxu0 %v316
    %388 = vmatmul.bf16.gmra.mxu0 0
    %v389 = vpop.f32.mrf.mxu0
    %v390 = vadd.f32 0.0, %v389
    %v391 = vpop.f32.mrf.mxu0
    %392 = vdwg.mxu0
    %393 = vmatpush.bf16.msra.mxu0 %v345
    %394 = vmatpush.bf16.msra.mxu0 %v341
    %395 = vmatpush.bf16.msra.mxu0 %v337
    %396 = vmatpush.bf16.msra.mxu0 %v333
    %397 = vmatpush.bf16.msra.mxu0 %v329
    %398 = vmatpush.bf16.msra.mxu0 %v325
    %399 = vmatpush.bf16.msra.mxu0 %v321
    %400 = vmatpush.bf16.msra.mxu0 %v317
    %401 = vmatmul.bf16.gmra.mxu0 0
    %v402 = vpop.f32.mrf.mxu0
    %v403 = vadd.f32 0.0, %v402
    %v404 = vpop.f32.mrf.mxu0
    %405 = vdwg.mxu0
    %406 = vmatpush.bf16.msra.mxu0 %v346
    %407 = vmatpush.bf16.msra.mxu0 %v342
    %408 = vmatpush.bf16.msra.mxu0 %v338
    %409 = vmatpush.bf16.msra.mxu0 %v334
    %410 = vmatpush.bf16.msra.mxu0 %v330
    %411 = vmatpush.bf16.msra.mxu0 %v326
    %412 = vmatpush.bf16.msra.mxu0 %v322
    %413 = vmatpush.bf16.msra.mxu0 %v318
    %414 = vmatmul.bf16.gmra.mxu0 0
    %v415 = vpop.f32.mrf.mxu0
    %v416 = vadd.f32 0.0, %v415
    %v417 = vpop.f32.mrf.mxu0
    %418 = vdwg.mxu0
    %419 = vmatpush.bf16.msra.mxu0 %v347
    %420 = vmatpush.bf16.msra.mxu0 %v343
    %421 = vmatpush.bf16.msra.mxu0 %v339
    %422 = vmatpush.bf16.msra.mxu0 %v335
    %423 = vmatpush.bf16.msra.mxu0 %v331
    %424 = vmatpush.bf16.msra.mxu0 %v327
    %425 = vmatpush.bf16.msra.mxu0 %v323
    %426 = vmatpush.bf16.msra.mxu0 %v319
    %427 = vmatmul.bf16.gmra.mxu0 0
    %v428 = vpop.f32.mrf.mxu0
    %v429 = vadd.f32 0.0, %v428
    %v430 = vpop.f32.mrf.mxu0
    %431 = vdwg.mxu0
    %v432 = vadd.f32 %v174, %v390
    %v433 = vadd.f32 %v188, %v403
    %v434 = vadd.f32 %v202, %v416
    %v435 = vadd.f32 %v216, %v429
    %v436 = vxor.u32 %v432, 2147483648
    %v437 = vmul.f32 %v436, 1.442695
    %v438 = vpow.pop %v437
    %v439 = vadd.f32 %v438, 1.0
    %v440 = vrcp.pop %v439
    %v441 = vmul.f32 %v439, %v440
    %v442 = vsub.f32 1.0, %v441
    %v443 = vmul.f32 %v440, %v442
    %v444 = vadd.f32 %v440, %v443
    %vm445 = vweird.f32 %v439
    %vm446 = vweird.f32 %v440
    %vm447 = vmor %vm445, %vm446
    %v448 = vsel %vm447, %v440, %v444
    %v449 = vand.u32 2147483647, %v439
    %vm450 = vcmp.eq.f32.partialorder %v449, 8.507059e+37
    %v451 = vand.u32 %v439, 2147483648
    %v452 = vor.u32 1.1754944e-38, %v451
    %v453 = vsel %vm450, %v452, %v448
    %v454 = vmul.f32 1.0, %v453
    %v455 = vxor.u32 %v433, 2147483648
    %v456 = vmul.f32 %v455, 1.442695
    %v457 = vpow.pop %v456
    %v458 = vadd.f32 %v457, 1.0
    %v459 = vrcp.pop %v458
    %v460 = vmul.f32 %v458, %v459
    %v461 = vsub.f32 1.0, %v460
    %v462 = vmul.f32 %v459, %v461
    %v463 = vadd.f32 %v459, %v462
    %vm464 = vweird.f32 %v458
    %vm465 = vweird.f32 %v459
    %vm466 = vmor %vm464, %vm465
    %v467 = vsel %vm466, %v459, %v463
    %v468 = vand.u32 2147483647, %v458
    %vm469 = vcmp.eq.f32.partialorder %v468, 8.507059e+37
    %v470 = vand.u32 %v458, 2147483648
    %v471 = vor.u32 1.1754944e-38, %v470
    %v472 = vsel %vm469, %v471, %v467
    %v473 = vmul.f32 1.0, %v472
    %v474 = vtanh.pop %v434
    %v475 = vxor.u32 %v435, 2147483648
    %v476 = vmul.f32 %v475, 1.442695
    %v477 = vpow.pop %v476
    %v478 = vadd.f32 %v477, 1.0
    %v479 = vrcp.pop %v478
    %v480 = vmul.f32 %v478, %v479
    %v481 = vsub.f32 1.0, %v480
    %v482 = vmul.f32 %v479, %v481
    %v483 = vadd.f32 %v479, %v482
    %vm484 = vweird.f32 %v478
    %vm485 = vweird.f32 %v479
    %vm486 = vmor %vm484, %vm485
    %v487 = vsel %vm486, %v479, %v483
    %v488 = vand.u32 2147483647, %v478
    %vm489 = vcmp.eq.f32.partialorder %v488, 8.507059e+37
    %v490 = vand.u32 %v478, 2147483648
    %v491 = vor.u32 1.1754944e-38, %v490
    %v492 = vsel %vm489, %v491, %v487
    %v493 = vmul.f32 1.0, %v492
    %v494 = vmul.f32 %v473, 0.0
    %v495 = vmul.f32 %v454, %v474
    %v496 = vadd.f32 %v494, %v495
    %v497 = vtanh.pop %v496
    %v498 = vmul.f32 %v493, %v497
    %v499 = vpack.c.bf16 %v498, %v498
    %500 = vmatpush.bf16.msra.mxu0 %v344
    %501 = vmatpush.bf16.msra.mxu0 %v340
    %502 = vmatpush.bf16.msra.mxu0 %v336
    %503 = vmatpush.bf16.msra.mxu0 %v332
    %504 = vmatpush.bf16.msra.mxu0 %v328
    %505 = vmatpush.bf16.msra.mxu0 %v324
    %506 = vmatpush.bf16.msra.mxu0 %v320
    %507 = vmatpush.bf16.msra.mxu0 %v316
    %508 = vmatmul.bf16.gmra.mxu0 %v499
    %v509 = vpop.f32.mrf.mxu0
    %v510 = vadd.f32 0.0, %v509
    %v511 = vpop.f32.mrf.mxu0
    %512 = vdwg.mxu0
    %513 = vmatpush.bf16.msra.mxu0 %v345
    %514 = vmatpush.bf16.msra.mxu0 %v341
    %515 = vmatpush.bf16.msra.mxu0 %v337
    %516 = vmatpush.bf16.msra.mxu0 %v333
    %517 = vmatpush.bf16.msra.mxu0 %v329
    %518 = vmatpush.bf16.msra.mxu0 %v325
    %519 = vmatpush.bf16.msra.mxu0 %v321
    %520 = vmatpush.bf16.msra.mxu0 %v317
    %521 = vmatmul.bf16.gmra.mxu0 %v499
    %v522 = vpop.f32.mrf.mxu0
    %v523 = vadd.f32 0.0, %v522
    %v524 = vpop.f32.mrf.mxu0
    %525 = vdwg.mxu0
    %526 = vmatpush.bf16.msra.mxu0 %v346
    %527 = vmatpush.bf16.msra.mxu0 %v342
    %528 = vmatpush.bf16.msra.mxu0 %v338
    %529 = vmatpush.bf16.msra.mxu0 %v334
    %530 = vmatpush.bf16.msra.mxu0 %v330
    %531 = vmatpush.bf16.msra.mxu0 %v326
    %532 = vmatpush.bf16.msra.mxu0 %v322
    %533 = vmatpush.bf16.msra.mxu0 %v318
    %534 = vmatmul.bf16.gmra.mxu0 %v499
    %v535 = vpop.f32.mrf.mxu0
    %v536 = vadd.f32 0.0, %v535
    %v537 = vpop.f32.mrf.mxu0
    %538 = vdwg.mxu0
    %539 = vmatpush.bf16.msra.mxu0 %v347
    %540 = vmatpush.bf16.msra.mxu0 %v343
    %541 = vmatpush.bf16.msra.mxu0 %v339
    %542 = vmatpush.bf16.msra.mxu0 %v335
    %543 = vmatpush.bf16.msra.mxu0 %v331
    %544 = vmatpush.bf16.msra.mxu0 %v327
    %545 = vmatpush.bf16.msra.mxu0 %v323
    %546 = vmatpush.bf16.msra.mxu0 %v319
    %547 = vmatmul.bf16.gmra.mxu0 %v499
    %v548 = vpop.f32.mrf.mxu0
    %v549 = vadd.f32 0.0, %v548
    %v550 = vpop.f32.mrf.mxu0
    %551 = vdwg.mxu0
    %v556 = vrot.slane %v510, 6
    %v557 = vrot.slane %v523, 6
    %v558 = vrot.slane %v536, 6
    %v559 = vrot.slane %v549, 6
    %v564 = vadd.f32 %v174, %v556
    %v565 = vadd.f32 %v188, %v557
    %v566 = vadd.f32 %v202, %v558
    %v567 = vadd.f32 %v216, %v559
    %v568 = vxor.u32 %v564, 2147483648
    %v569 = vmul.f32 %v568, 1.442695
    %v570 = vpow.pop %v569
    %v571 = vadd.f32 %v570, 1.0
    %v572 = vrcp.pop %v571
    %v573 = vmul.f32 %v571, %v572
    %v574 = vsub.f32 1.0, %v573
    %v575 = vmul.f32 %v572, %v574
    %v576 = vadd.f32 %v572, %v575
    %vm577 = vweird.f32 %v571
    %vm578 = vweird.f32 %v572
    %vm579 = vmor %vm577, %vm578
    %v580 = vsel %vm579, %v572, %v576
    %v581 = vand.u32 2147483647, %v571
    %vm582 = vcmp.eq.f32.partialorder %v581, 8.507059e+37
    %v583 = vand.u32 %v571, 2147483648
    %v584 = vor.u32 1.1754944e-38, %v583
    %v585 = vsel %vm582, %v584, %v580
    %v586 = vmul.f32 1.0, %v585
    %v587 = vxor.u32 %v565, 2147483648
    %v588 = vmul.f32 %v587, 1.442695
    %v589 = vpow.pop %v588
    %v590 = vadd.f32 %v589, 1.0
    %v591 = vrcp.pop %v590
    %v592 = vmul.f32 %v590, %v591
    %v593 = vsub.f32 1.0, %v592
    %v594 = vmul.f32 %v591, %v593
    %v595 = vadd.f32 %v591, %v594
    %vm596 = vweird.f32 %v590
    %vm597 = vweird.f32 %v591
    %vm598 = vmor %vm596, %vm597
    %v599 = vsel %vm598, %v591, %v595
    %v600 = vand.u32 2147483647, %v590
    %vm601 = vcmp.eq.f32.partialorder %v600, 8.507059e+37
    %v602 = vand.u32 %v590, 2147483648
    %v603 = vor.u32 1.1754944e-38, %v602
    %v604 = vsel %vm601, %v603, %v599
    %v605 = vmul.f32 1.0, %v604
    %v606 = vtanh.pop %v566
    %v607 = vxor.u32 %v567, 2147483648
    %v608 = vmul.f32 %v607, 1.442695
    %v609 = vpow.pop %v608
    %v610 = vadd.f32 %v609, 1.0
    %v611 = vrcp.pop %v610
    %v612 = vmul.f32 %v610, %v611
    %v613 = vsub.f32 1.0, %v612
    %v614 = vmul.f32 %v611, %v613
    %v615 = vadd.f32 %v611, %v614
    %vm616 = vweird.f32 %v610
    %vm617 = vweird.f32 %v611
    %vm618 = vmor %vm616, %vm617
    %v619 = vsel %vm618, %v611, %v615
    %v620 = vand.u32 2147483647, %v610
    %vm621 = vcmp.eq.f32.partialorder %v620, 8.507059e+37
    %v622 = vand.u32 %v610, 2147483648
    %v623 = vor.u32 1.1754944e-38, %v622
    %v624 = vsel %vm621, %v623, %v619
    %v625 = vmul.f32 1.0, %v624
    %v627 = vrot.slane %v496, 6
    %v629 = vmul.f32 %v605, %v627
    %v630 = vmul.f32 %v586, %v606
    %v631 = vadd.f32 %v629, %v630
    %v632 = vtanh.pop %v631
    %v633 = vmul.f32 %v625, %v632
    %v634 = vpack.c.bf16 %v633, %v633
    %v636 = vrot.slane %v634, 1
    %638 = vmatpush.bf16.msra.mxu0 %v344
    %639 = vmatpush.bf16.msra.mxu0 %v340
    %640 = vmatpush.bf16.msra.mxu0 %v336
    %641 = vmatpush.bf16.msra.mxu0 %v332
    %642 = vmatpush.bf16.msra.mxu0 %v328
    %643 = vmatpush.bf16.msra.mxu0 %v324
    %644 = vmatpush.bf16.msra.mxu0 %v320
    %645 = vmatpush.bf16.msra.mxu0 %v316
    %646 = vmatmul.bf16.gmra.mxu0 %v636
    %v647 = vpop.f32.mrf.mxu0
    %v648 = vadd.f32 0.0, %v647
    %v649 = vpop.f32.mrf.mxu0
    %650 = vdwg.mxu0
    %651 = vmatpush.bf16.msra.mxu0 %v345
    %652 = vmatpush.bf16.msra.mxu0 %v341
    %653 = vmatpush.bf16.msra.mxu0 %v337
    %654 = vmatpush.bf16.msra.mxu0 %v333
    %655 = vmatpush.bf16.msra.mxu0 %v329
    %656 = vmatpush.bf16.msra.mxu0 %v325
    %657 = vmatpush.bf16.msra.mxu0 %v321
    %658 = vmatpush.bf16.msra.mxu0 %v317
    %659 = vmatmul.bf16.gmra.mxu0 %v636
    %v660 = vpop.f32.mrf.mxu0
    %v661 = vadd.f32 0.0, %v660
    %v662 = vpop.f32.mrf.mxu0
    %663 = vdwg.mxu0
    %664 = vmatpush.bf16.msra.mxu0 %v346
    %665 = vmatpush.bf16.msra.mxu0 %v342
    %666 = vmatpush.bf16.msra.mxu0 %v338
    %667 = vmatpush.bf16.msra.mxu0 %v334
    %668 = vmatpush.bf16.msra.mxu0 %v330
    %669 = vmatpush.bf16.msra.mxu0 %v326
    %670 = vmatpush.bf16.msra.mxu0 %v322
    %671 = vmatpush.bf16.msra.mxu0 %v318
    %672 = vmatmul.bf16.gmra.mxu0 %v636
    %v673 = vpop.f32.mrf.mxu0
    %v674 = vadd.f32 0.0, %v673
    %v675 = vpop.f32.mrf.mxu0
    %676 = vdwg.mxu0
    %677 = vmatpush.bf16.msra.mxu0 %v347
    %678 = vmatpush.bf16.msra.mxu0 %v343
    %679 = vmatpush.bf16.msra.mxu0 %v339
    %680 = vmatpush.bf16.msra.mxu0 %v335
    %681 = vmatpush.bf16.msra.mxu0 %v331
    %682 = vmatpush.bf16.msra.mxu0 %v327
    %683 = vmatpush.bf16.msra.mxu0 %v323
    %684 = vmatpush.bf16.msra.mxu0 %v319
    %685 = vmatmul.bf16.gmra.mxu0 %v636
    %v686 = vpop.f32.mrf.mxu0
    %v687 = vadd.f32 0.0, %v686
    %v688 = vpop.f32.mrf.mxu0
    %689 = vdwg.mxu0
    %v694 = vrot.slane %v648, 4
    %v695 = vrot.slane %v661, 4
    %v696 = vrot.slane %v674, 4
    %v697 = vrot.slane %v687, 4
    %v702 = vadd.f32 %v174, %v694
    %v703 = vadd.f32 %v188, %v695
    %v704 = vadd.f32 %v202, %v696
    %v705 = vadd.f32 %v216, %v697
    %v706 = vxor.u32 %v702, 2147483648
    %v707 = vmul.f32 %v706, 1.442695
    %v708 = vpow.pop %v707
    %v709 = vadd.f32 %v708, 1.0
    %v710 = vrcp.pop %v709
    %v711 = vmul.f32 %v709, %v710
    %v712 = vsub.f32 1.0, %v711
    %v713 = vmul.f32 %v710, %v712
    %v714 = vadd.f32 %v710, %v713
    %vm715 = vweird.f32 %v709
    %vm716 = vweird.f32 %v710
    %vm717 = vmor %vm715, %vm716
    %v718 = vsel %vm717, %v710, %v714
    %v719 = vand.u32 2147483647, %v709
    %vm720 = vcmp.eq.f32.partialorder %v719, 8.507059e+37
    %v721 = vand.u32 %v709, 2147483648
    %v722 = vor.u32 1.1754944e-38, %v721
    %v723 = vsel %vm720, %v722, %v718
    %v724 = vmul.f32 1.0, %v723
    %v725 = vxor.u32 %v703, 2147483648
    %v726 = vmul.f32 %v725, 1.442695
    %v727 = vpow.pop %v726
    %v728 = vadd.f32 %v727, 1.0
    %v729 = vrcp.pop %v728
    %v730 = vmul.f32 %v728, %v729
    %v731 = vsub.f32 1.0, %v730
    %v732 = vmul.f32 %v729, %v731
    %v733 = vadd.f32 %v729, %v732
    %vm734 = vweird.f32 %v728
    %vm735 = vweird.f32 %v729
    %vm736 = vmor %vm734, %vm735
    %v737 = vsel %vm736, %v729, %v733
    %v738 = vand.u32 2147483647, %v728
    %vm739 = vcmp.eq.f32.partialorder %v738, 8.507059e+37
    %v740 = vand.u32 %v728, 2147483648
    %v741 = vor.u32 1.1754944e-38, %v740
    %v742 = vsel %vm739, %v741, %v737
    %v743 = vmul.f32 1.0, %v742
    %v744 = vtanh.pop %v704
    %v745 = vxor.u32 %v705, 2147483648
    %v746 = vmul.f32 %v745, 1.442695
    %v747 = vpow.pop %v746
    %v748 = vadd.f32 %v747, 1.0
    %v749 = vrcp.pop %v748
    %v750 = vmul.f32 %v748, %v749
    %v751 = vsub.f32 1.0, %v750
    %v752 = vmul.f32 %v749, %v751
    %v753 = vadd.f32 %v749, %v752
    %vm754 = vweird.f32 %v748
    %vm755 = vweird.f32 %v749
    %vm756 = vmor %vm754, %vm755
    %v757 = vsel %vm756, %v749, %v753
    %v758 = vand.u32 2147483647, %v748
    %vm759 = vcmp.eq.f32.partialorder %v758, 8.507059e+37
    %v760 = vand.u32 %v748, 2147483648
    %v761 = vor.u32 1.1754944e-38, %v760
    %v762 = vsel %vm759, %v761, %v757
    %v763 = vmul.f32 1.0, %v762
    %v765 = vrot.slane %v631, 6
    %v767 = vmul.f32 %v743, %v765
    %v768 = vmul.f32 %v724, %v744
    %v769 = vadd.f32 %v767, %v768
    %v770 = vtanh.pop %v769
    %v771 = vmul.f32 %v763, %v770
    %v772 = vpack.c.bf16 %v771, %v771
    %v774 = vrot.slane %v772, 2
    %776 = vmatpush.bf16.msra.mxu0 %v344
    %777 = vmatpush.bf16.msra.mxu0 %v340
    %778 = vmatpush.bf16.msra.mxu0 %v336
    %779 = vmatpush.bf16.msra.mxu0 %v332
    %780 = vmatpush.bf16.msra.mxu0 %v328
    %781 = vmatpush.bf16.msra.mxu0 %v324
    %782 = vmatpush.bf16.msra.mxu0 %v320
    %783 = vmatpush.bf16.msra.mxu0 %v316
    %784 = vmatmul.bf16.gmra.mxu0 %v774
    %v785 = vpop.f32.mrf.mxu0
    %v786 = vadd.f32 0.0, %v785
    %v787 = vpop.f32.mrf.mxu0
    %788 = vdwg.mxu0
    %789 = vmatpush.bf16.msra.mxu0 %v345
    %790 = vmatpush.bf16.msra.mxu0 %v341
    %791 = vmatpush.bf16.msra.mxu0 %v337
    %792 = vmatpush.bf16.msra.mxu0 %v333
    %793 = vmatpush.bf16.msra.mxu0 %v329
    %794 = vmatpush.bf16.msra.mxu0 %v325
    %795 = vmatpush.bf16.msra.mxu0 %v321
    %796 = vmatpush.bf16.msra.mxu0 %v317
    %797 = vmatmul.bf16.gmra.mxu0 %v774
    %v798 = vpop.f32.mrf.mxu0
    %v799 = vadd.f32 0.0, %v798
    %v800 = vpop.f32.mrf.mxu0
    %801 = vdwg.mxu0
    %802 = vmatpush.bf16.msra.mxu0 %v346
    %803 = vmatpush.bf16.msra.mxu0 %v342
    %804 = vmatpush.bf16.msra.mxu0 %v338
    %805 = vmatpush.bf16.msra.mxu0 %v334
    %806 = vmatpush.bf16.msra.mxu0 %v330
    %807 = vmatpush.bf16.msra.mxu0 %v326
    %808 = vmatpush.bf16.msra.mxu0 %v322
    %809 = vmatpush.bf16.msra.mxu0 %v318
    %810 = vmatmul.bf16.gmra.mxu0 %v774
    %v811 = vpop.f32.mrf.mxu0
    %v812 = vadd.f32 0.0, %v811
    %v813 = vpop.f32.mrf.mxu0
    %814 = vdwg.mxu0
    %815 = vmatpush.bf16.msra.mxu0 %v347
    %816 = vmatpush.bf16.msra.mxu0 %v343
    %817 = vmatpush.bf16.msra.mxu0 %v339
    %818 = vmatpush.bf16.msra.mxu0 %v335
    %819 = vmatpush.bf16.msra.mxu0 %v331
    %820 = vmatpush.bf16.msra.mxu0 %v327
    %821 = vmatpush.bf16.msra.mxu0 %v323
    %822 = vmatpush.bf16.msra.mxu0 %v319
    %823 = vmatmul.bf16.gmra.mxu0 %v774
    %v824 = vpop.f32.mrf.mxu0
    %v825 = vadd.f32 0.0, %v824
    %v826 = vpop.f32.mrf.mxu0
    %827 = vdwg.mxu0
    %v832 = vrot.slane %v786, 2
    %v833 = vrot.slane %v799, 2
    %v834 = vrot.slane %v812, 2
    %v835 = vrot.slane %v825, 2
    %v840 = vadd.f32 %v174, %v832
    %v841 = vadd.f32 %v188, %v833
    %v842 = vadd.f32 %v202, %v834
    %v843 = vadd.f32 %v216, %v835
    %v844 = vxor.u32 %v840, 2147483648
    %v845 = vmul.f32 %v844, 1.442695
    %v846 = vpow.pop %v845
    %v847 = vadd.f32 %v846, 1.0
    %v848 = vrcp.pop %v847
    %v849 = vmul.f32 %v847, %v848
    %v850 = vsub.f32 1.0, %v849
    %v851 = vmul.f32 %v848, %v850
    %v852 = vadd.f32 %v848, %v851
    %vm853 = vweird.f32 %v847
    %vm854 = vweird.f32 %v848
    %vm855 = vmor %vm853, %vm854
    %v856 = vsel %vm855, %v848, %v852
    %v857 = vand.u32 2147483647, %v847
    %vm858 = vcmp.eq.f32.partialorder %v857, 8.507059e+37
    %v859 = vand.u32 %v847, 2147483648
    %v860 = vor.u32 1.1754944e-38, %v859
    %v861 = vsel %vm858, %v860, %v856
    %v862 = vmul.f32 1.0, %v861
    %v863 = vxor.u32 %v841, 2147483648
    %v864 = vmul.f32 %v863, 1.442695
    %v865 = vpow.pop %v864
    %v866 = vadd.f32 %v865, 1.0
    %v867 = vrcp.pop %v866
    %v868 = vmul.f32 %v866, %v867
    %v869 = vsub.f32 1.0, %v868
    %v870 = vmul.f32 %v867, %v869
    %v871 = vadd.f32 %v867, %v870
    %vm872 = vweird.f32 %v866
    %vm873 = vweird.f32 %v867
    %vm874 = vmor %vm872, %vm873
    %v875 = vsel %vm874, %v867, %v871
    %v876 = vand.u32 2147483647, %v866
    %vm877 = vcmp.eq.f32.partialorder %v876, 8.507059e+37
    %v878 = vand.u32 %v866, 2147483648
    %v879 = vor.u32 1.1754944e-38, %v878
    %v880 = vsel %vm877, %v879, %v875
    %v881 = vmul.f32 1.0, %v880
    %v882 = vtanh.pop %v842
    %v883 = vxor.u32 %v843, 2147483648
    %v884 = vmul.f32 %v883, 1.442695
    %v885 = vpow.pop %v884
    %v886 = vadd.f32 %v885, 1.0
    %v887 = vrcp.pop %v886
    %v888 = vmul.f32 %v886, %v887
    %v889 = vsub.f32 1.0, %v888
    %v890 = vmul.f32 %v887, %v889
    %v891 = vadd.f32 %v887, %v890
    %vm892 = vweird.f32 %v886
    %vm893 = vweird.f32 %v887
    %vm894 = vmor %vm892, %vm893
    %v895 = vsel %vm894, %v887, %v891
    %v896 = vand.u32 2147483647, %v886
    %vm897 = vcmp.eq.f32.partialorder %v896, 8.507059e+37
    %v898 = vand.u32 %v886, 2147483648
    %v899 = vor.u32 1.1754944e-38, %v898
    %v900 = vsel %vm897, %v899, %v895
    %v901 = vmul.f32 1.0, %v900
    %v903 = vrot.slane %v769, 6
    %v905 = vmul.f32 %v881, %v903
    %v906 = vmul.f32 %v862, %v882
    %v907 = vadd.f32 %v905, %v906
    %v908 = vtanh.pop %v907
    %v909 = vmul.f32 %v901, %v908
    %v910 = vpack.c.bf16 %v909, %v909
    %v912 = vrot.slane %v910, 3
    %914 = vmatpush.bf16.msra.mxu0 %v344
    %915 = vmatpush.bf16.msra.mxu0 %v340
    %916 = vmatpush.bf16.msra.mxu0 %v336
    %917 = vmatpush.bf16.msra.mxu0 %v332
    %918 = vmatpush.bf16.msra.mxu0 %v328
    %919 = vmatpush.bf16.msra.mxu0 %v324
    %920 = vmatpush.bf16.msra.mxu0 %v320
    %921 = vmatpush.bf16.msra.mxu0 %v316
    %922 = vmatmul.bf16.gmra.mxu0 %v912
    %v923 = vpop.f32.mrf.mxu0
    %v924 = vadd.f32 0.0, %v923
    %v925 = vpop.f32.mrf.mxu0
    %926 = vdwg.mxu0
    %927 = vmatpush.bf16.msra.mxu0 %v345
    %928 = vmatpush.bf16.msra.mxu0 %v341
    %929 = vmatpush.bf16.msra.mxu0 %v337
    %930 = vmatpush.bf16.msra.mxu0 %v333
    %931 = vmatpush.bf16.msra.mxu0 %v329
    %932 = vmatpush.bf16.msra.mxu0 %v325
    %933 = vmatpush.bf16.msra.mxu0 %v321
    %934 = vmatpush.bf16.msra.mxu0 %v317
    %935 = vmatmul.bf16.gmra.mxu0 %v912
    %v936 = vpop.f32.mrf.mxu0
    %v937 = vadd.f32 0.0, %v936
    %v938 = vpop.f32.mrf.mxu0
    %939 = vdwg.mxu0
    %940 = vmatpush.bf16.msra.mxu0 %v346
    %941 = vmatpush.bf16.msra.mxu0 %v342
    %942 = vmatpush.bf16.msra.mxu0 %v338
    %943 = vmatpush.bf16.msra.mxu0 %v334
    %944 = vmatpush.bf16.msra.mxu0 %v330
    %945 = vmatpush.bf16.msra.mxu0 %v326
    %946 = vmatpush.bf16.msra.mxu0 %v322
    %947 = vmatpush.bf16.msra.mxu0 %v318
    %948 = vmatmul.bf16.gmra.mxu0 %v912
    %v949 = vpop.f32.mrf.mxu0
    %v950 = vadd.f32 0.0, %v949
    %v951 = vpop.f32.mrf.mxu0
    %952 = vdwg.mxu0
    %953 = vmatpush.bf16.msra.mxu0 %v347
    %954 = vmatpush.bf16.msra.mxu0 %v343
    %955 = vmatpush.bf16.msra.mxu0 %v339
    %956 = vmatpush.bf16.msra.mxu0 %v335
    %957 = vmatpush.bf16.msra.mxu0 %v331
    %958 = vmatpush.bf16.msra.mxu0 %v327
    %959 = vmatpush.bf16.msra.mxu0 %v323
    %960 = vmatpush.bf16.msra.mxu0 %v319
    %961 = vmatmul.bf16.gmra.mxu0 %v912
    %v962 = vpop.f32.mrf.mxu0
    %v963 = vadd.f32 0.0, %v962
    %v964 = vpop.f32.mrf.mxu0
    %965 = vdwg.mxu0
    %v966 = vadd.f32 %v176, %v924
    %v967 = vadd.f32 %v190, %v937
    %v968 = vadd.f32 %v204, %v950
    %v969 = vadd.f32 %v218, %v963
    %v970 = vxor.u32 %v966, 2147483648
    %v971 = vmul.f32 %v970, 1.442695
    %v972 = vpow.pop %v971
    %v973 = vadd.f32 %v972, 1.0
    %v974 = vrcp.pop %v973
    %v975 = vmul.f32 %v973, %v974
    %v976 = vsub.f32 1.0, %v975
    %v977 = vmul.f32 %v974, %v976
    %v978 = vadd.f32 %v974, %v977
    %vm979 = vweird.f32 %v973
    %vm980 = vweird.f32 %v974
    %vm981 = vmor %vm979, %vm980
    %v982 = vsel %vm981, %v974, %v978
    %v983 = vand.u32 2147483647, %v973
    %vm984 = vcmp.eq.f32.partialorder %v983, 8.507059e+37
    %v985 = vand.u32 %v973, 2147483648
    %v986 = vor.u32 1.1754944e-38, %v985
    %v987 = vsel %vm984, %v986, %v982
    %v988 = vmul.f32 1.0, %v987
    %v989 = vxor.u32 %v967, 2147483648
    %v990 = vmul.f32 %v989, 1.442695
    %v991 = vpow.pop %v990
    %v992 = vadd.f32 %v991, 1.0
    %v993 = vrcp.pop %v992
    %v994 = vmul.f32 %v992, %v993
    %v995 = vsub.f32 1.0, %v994
    %v996 = vmul.f32 %v993, %v995
    %v997 = vadd.f32 %v993, %v996
    %vm998 = vweird.f32 %v992
    %vm999 = vweird.f32 %v993
    %vm1000 = vmor %vm998, %vm999
    %v1001 = vsel %vm1000, %v993, %v997
    %v1002 = vand.u32 2147483647, %v992
    %vm1003 = vcmp.eq.f32.partialorder %v1002, 8.507059e+37
    %v1004 = vand.u32 %v992, 2147483648
    %v1005 = vor.u32 1.1754944e-38, %v1004
    %v1006 = vsel %vm1003, %v1005, %v1001
    %v1007 = vmul.f32 1.0, %v1006
    %v1008 = vtanh.pop %v968
    %v1009 = vxor.u32 %v969, 2147483648
    %v1010 = vmul.f32 %v1009, 1.442695
    %v1011 = vpow.pop %v1010
    %v1012 = vadd.f32 %v1011, 1.0
    %v1013 = vrcp.pop %v1012
    %v1014 = vmul.f32 %v1012, %v1013
    %v1015 = vsub.f32 1.0, %v1014
    %v1016 = vmul.f32 %v1013, %v1015
    %v1017 = vadd.f32 %v1013, %v1016
    %vm1018 = vweird.f32 %v1012
    %vm1019 = vweird.f32 %v1013
    %vm1020 = vmor %vm1018, %vm1019
    %v1021 = vsel %vm1020, %v1013, %v1017
    %v1022 = vand.u32 2147483647, %v1012
    %vm1023 = vcmp.eq.f32.partialorder %v1022, 8.507059e+37
    %v1024 = vand.u32 %v1012, 2147483648
    %v1025 = vor.u32 1.1754944e-38, %v1024
    %v1026 = vsel %vm1023, %v1025, %v1021
    %v1027 = vmul.f32 1.0, %v1026
    %v1029 = vrot.slane %v907, 6
    %v1031 = vmul.f32 %v1007, %v1029
    %v1032 = vmul.f32 %v988, %v1008
    %v1033 = vadd.f32 %v1031, %v1032
    %v1034 = vtanh.pop %v1033
    %v1035 = vmul.f32 %v1027, %v1034
    %v1036 = vpack.c.bf16 %v1035, %v1035
    %1037 = vmatpush.bf16.msra.mxu0 %v344
    %1038 = vmatpush.bf16.msra.mxu0 %v340
    %1039 = vmatpush.bf16.msra.mxu0 %v336
    %1040 = vmatpush.bf16.msra.mxu0 %v332
    %1041 = vmatpush.bf16.msra.mxu0 %v328
    %1042 = vmatpush.bf16.msra.mxu0 %v324
    %1043 = vmatpush.bf16.msra.mxu0 %v320
    %1044 = vmatpush.bf16.msra.mxu0 %v316
    %1045 = vmatmul.bf16.gmra.mxu0 %v1036
    %v1046 = vpop.f32.mrf.mxu0
    %v1047 = vadd.f32 0.0, %v1046
    %v1048 = vpop.f32.mrf.mxu0
    %1049 = vdwg.mxu0
    %1050 = vmatpush.bf16.msra.mxu0 %v345
    %1051 = vmatpush.bf16.msra.mxu0 %v341
    %1052 = vmatpush.bf16.msra.mxu0 %v337
    %1053 = vmatpush.bf16.msra.mxu0 %v333
    %1054 = vmatpush.bf16.msra.mxu0 %v329
    %1055 = vmatpush.bf16.msra.mxu0 %v325
    %1056 = vmatpush.bf16.msra.mxu0 %v321
    %1057 = vmatpush.bf16.msra.mxu0 %v317
    %1058 = vmatmul.bf16.gmra.mxu0 %v1036
    %v1059 = vpop.f32.mrf.mxu0
    %v1060 = vadd.f32 0.0, %v1059
    %v1061 = vpop.f32.mrf.mxu0
    %1062 = vdwg.mxu0
    %1063 = vmatpush.bf16.msra.mxu0 %v346
    %1064 = vmatpush.bf16.msra.mxu0 %v342
    %1065 = vmatpush.bf16.msra.mxu0 %v338
    %1066 = vmatpush.bf16.msra.mxu0 %v334
    %1067 = vmatpush.bf16.msra.mxu0 %v330
    %1068 = vmatpush.bf16.msra.mxu0 %v326
    %1069 = vmatpush.bf16.msra.mxu0 %v322
    %1070 = vmatpush.bf16.msra.mxu0 %v318
    %1071 = vmatmul.bf16.gmra.mxu0 %v1036
    %v1072 = vpop.f32.mrf.mxu0
    %v1073 = vadd.f32 0.0, %v1072
    %v1074 = vpop.f32.mrf.mxu0
    %1075 = vdwg.mxu0
    %1076 = vmatpush.bf16.msra.mxu0 %v347
    %1077 = vmatpush.bf16.msra.mxu0 %v343
    %1078 = vmatpush.bf16.msra.mxu0 %v339
    %1079 = vmatpush.bf16.msra.mxu0 %v335
    %1080 = vmatpush.bf16.msra.mxu0 %v331
    %1081 = vmatpush.bf16.msra.mxu0 %v327
    %1082 = vmatpush.bf16.msra.mxu0 %v323
    %1083 = vmatpush.bf16.msra.mxu0 %v319
    %1084 = vmatmul.bf16.gmra.mxu0 %v1036
    %v1085 = vpop.f32.mrf.mxu0
    %v1086 = vadd.f32 0.0, %v1085
    %v1087 = vpop.f32.mrf.mxu0
    %1088 = vdwg.mxu0
    %v1093 = vrot.slane %v1047, 6
    %v1094 = vrot.slane %v1060, 6
    %v1095 = vrot.slane %v1073, 6
    %v1096 = vrot.slane %v1086, 6
    %v1101 = vadd.f32 %v176, %v1093
    %v1102 = vadd.f32 %v190, %v1094
    %v1103 = vadd.f32 %v204, %v1095
    %v1104 = vadd.f32 %v218, %v1096
    %v1105 = vxor.u32 %v1101, 2147483648
    %v1106 = vmul.f32 %v1105, 1.442695
    %v1107 = vpow.pop %v1106
    %v1108 = vadd.f32 %v1107, 1.0
    %v1109 = vrcp.pop %v1108
    %v1110 = vmul.f32 %v1108, %v1109
    %v1111 = vsub.f32 1.0, %v1110
    %v1112 = vmul.f32 %v1109, %v1111
    %v1113 = vadd.f32 %v1109, %v1112
    %vm1114 = vweird.f32 %v1108
    %vm1115 = vweird.f32 %v1109
    %vm1116 = vmor %vm1114, %vm1115
    %v1117 = vsel %vm1116, %v1109, %v1113
    %v1118 = vand.u32 2147483647, %v1108
    %vm1119 = vcmp.eq.f32.partialorder %v1118, 8.507059e+37
    %v1120 = vand.u32 %v1108, 2147483648
    %v1121 = vor.u32 1.1754944e-38, %v1120
    %v1122 = vsel %vm1119, %v1121, %v1117
    %v1123 = vmul.f32 1.0, %v1122
    %v1124 = vxor.u32 %v1102, 2147483648
    %v1125 = vmul.f32 %v1124, 1.442695
    %v1126 = vpow.pop %v1125
    %v1127 = vadd.f32 %v1126, 1.0
    %v1128 = vrcp.pop %v1127
    %v1129 = vmul.f32 %v1127, %v1128
    %v1130 = vsub.f32 1.0, %v1129
    %v1131 = vmul.f32 %v1128, %v1130
    %v1132 = vadd.f32 %v1128, %v1131
    %vm1133 = vweird.f32 %v1127
    %vm1134 = vweird.f32 %v1128
    %vm1135 = vmor %vm1133, %vm1134
    %v1136 = vsel %vm1135, %v1128, %v1132
    %v1137 = vand.u32 2147483647, %v1127
    %vm1138 = vcmp.eq.f32.partialorder %v1137, 8.507059e+37
    %v1139 = vand.u32 %v1127, 2147483648
    %v1140 = vor.u32 1.1754944e-38, %v1139
    %v1141 = vsel %vm1138, %v1140, %v1136
    %v1142 = vmul.f32 1.0, %v1141
    %v1143 = vtanh.pop %v1103
    %v1144 = vxor.u32 %v1104, 2147483648
    %v1145 = vmul.f32 %v1144, 1.442695
    %v1146 = vpow.pop %v1145
    %v1147 = vadd.f32 %v1146, 1.0
    %v1148 = vrcp.pop %v1147
    %v1149 = vmul.f32 %v1147, %v1148
    %v1150 = vsub.f32 1.0, %v1149
    %v1151 = vmul.f32 %v1148, %v1150
    %v1152 = vadd.f32 %v1148, %v1151
    %vm1153 = vweird.f32 %v1147
    %vm1154 = vweird.f32 %v1148
    %vm1155 = vmor %vm1153, %vm1154
    %v1156 = vsel %vm1155, %v1148, %v1152
    %v1157 = vand.u32 2147483647, %v1147
    %vm1158 = vcmp.eq.f32.partialorder %v1157, 8.507059e+37
    %v1159 = vand.u32 %v1147, 2147483648
    %v1160 = vor.u32 1.1754944e-38, %v1159
    %v1161 = vsel %vm1158, %v1160, %v1156
    %v1162 = vmul.f32 1.0, %v1161
    %v1164 = vrot.slane %v1033, 6
    %v1166 = vmul.f32 %v1142, %v1164
    %v1167 = vmul.f32 %v1123, %v1143
    %v1168 = vadd.f32 %v1166, %v1167
    %v1169 = vtanh.pop %v1168
    %v1170 = vmul.f32 %v1162, %v1169
    %v1171 = vpack.c.bf16 %v1170, %v1170
    %v1173 = vrot.slane %v1171, 1
    %1175 = vmatpush.bf16.msra.mxu0 %v344
    %1176 = vmatpush.bf16.msra.mxu0 %v340
    %1177 = vmatpush.bf16.msra.mxu0 %v336
    %1178 = vmatpush.bf16.msra.mxu0 %v332
    %1179 = vmatpush.bf16.msra.mxu0 %v328
    %1180 = vmatpush.bf16.msra.mxu0 %v324
    %1181 = vmatpush.bf16.msra.mxu0 %v320
    %1182 = vmatpush.bf16.msra.mxu0 %v316
    %1183 = vmatmul.bf16.gmra.mxu0 %v1173
    %v1184 = vpop.f32.mrf.mxu0
    %v1185 = vadd.f32 0.0, %v1184
    %v1186 = vpop.f32.mrf.mxu0
    %1187 = vdwg.mxu0
    %1188 = vmatpush.bf16.msra.mxu0 %v345
    %1189 = vmatpush.bf16.msra.mxu0 %v341
    %1190 = vmatpush.bf16.msra.mxu0 %v337
    %1191 = vmatpush.bf16.msra.mxu0 %v333
    %1192 = vmatpush.bf16.msra.mxu0 %v329
    %1193 = vmatpush.bf16.msra.mxu0 %v325
    %1194 = vmatpush.bf16.msra.mxu0 %v321
    %1195 = vmatpush.bf16.msra.mxu0 %v317
    %1196 = vmatmul.bf16.gmra.mxu0 %v1173
    %v1197 = vpop.f32.mrf.mxu0
    %v1198 = vadd.f32 0.0, %v1197
    %v1199 = vpop.f32.mrf.mxu0
    %1200 = vdwg.mxu0
    %1201 = vmatpush.bf16.msra.mxu0 %v346
    %1202 = vmatpush.bf16.msra.mxu0 %v342
    %1203 = vmatpush.bf16.msra.mxu0 %v338
    %1204 = vmatpush.bf16.msra.mxu0 %v334
    %1205 = vmatpush.bf16.msra.mxu0 %v330
    %1206 = vmatpush.bf16.msra.mxu0 %v326
    %1207 = vmatpush.bf16.msra.mxu0 %v322
    %1208 = vmatpush.bf16.msra.mxu0 %v318
    %1209 = vmatmul.bf16.gmra.mxu0 %v1173
    %v1210 = vpop.f32.mrf.mxu0
    %v1211 = vadd.f32 0.0, %v1210
    %v1212 = vpop.f32.mrf.mxu0
    %1213 = vdwg.mxu0
    %1214 = vmatpush.bf16.msra.mxu0 %v347
    %1215 = vmatpush.bf16.msra.mxu0 %v343
    %1216 = vmatpush.bf16.msra.mxu0 %v339
    %1217 = vmatpush.bf16.msra.mxu0 %v335
    %1218 = vmatpush.bf16.msra.mxu0 %v331
    %1219 = vmatpush.bf16.msra.mxu0 %v327
    %1220 = vmatpush.bf16.msra.mxu0 %v323
    %1221 = vmatpush.bf16.msra.mxu0 %v319
    %1222 = vmatmul.bf16.gmra.mxu0 %v1173
    %v1223 = vpop.f32.mrf.mxu0
    %v1224 = vadd.f32 0.0, %v1223
    %v1225 = vpop.f32.mrf.mxu0
    %1226 = vdwg.mxu0
    %v1231 = vrot.slane %v1185, 4
    %v1232 = vrot.slane %v1198, 4
    %v1233 = vrot.slane %v1211, 4
    %v1234 = vrot.slane %v1224, 4
    %v1239 = vadd.f32 %v176, %v1231
    %v1240 = vadd.f32 %v190, %v1232
    %v1241 = vadd.f32 %v204, %v1233
    %v1242 = vadd.f32 %v218, %v1234
    %v1243 = vxor.u32 %v1239, 2147483648
    %v1244 = vmul.f32 %v1243, 1.442695
    %v1245 = vpow.pop %v1244
    %v1246 = vadd.f32 %v1245, 1.0
    %v1247 = vrcp.pop %v1246
    %v1248 = vmul.f32 %v1246, %v1247
    %v1249 = vsub.f32 1.0, %v1248
    %v1250 = vmul.f32 %v1247, %v1249
    %v1251 = vadd.f32 %v1247, %v1250
    %vm1252 = vweird.f32 %v1246
    %vm1253 = vweird.f32 %v1247
    %vm1254 = vmor %vm1252, %vm1253
    %v1255 = vsel %vm1254, %v1247, %v1251
    %v1256 = vand.u32 2147483647, %v1246
    %vm1257 = vcmp.eq.f32.partialorder %v1256, 8.507059e+37
    %v1258 = vand.u32 %v1246, 2147483648
    %v1259 = vor.u32 1.1754944e-38, %v1258
    %v1260 = vsel %vm1257, %v1259, %v1255
    %v1261 = vmul.f32 1.0, %v1260
    %v1262 = vxor.u32 %v1240, 2147483648
    %v1263 = vmul.f32 %v1262, 1.442695
    %v1264 = vpow.pop %v1263
    %v1265 = vadd.f32 %v1264, 1.0
    %v1266 = vrcp.pop %v1265
    %v1267 = vmul.f32 %v1265, %v1266
    %v1268 = vsub.f32 1.0, %v1267
    %v1269 = vmul.f32 %v1266, %v1268
    %v1270 = vadd.f32 %v1266, %v1269
    %vm1271 = vweird.f32 %v1265
    %vm1272 = vweird.f32 %v1266
    %vm1273 = vmor %vm1271, %vm1272
    %v1274 = vsel %vm1273, %v1266, %v1270
    %v1275 = vand.u32 2147483647, %v1265
    %vm1276 = vcmp.eq.f32.partialorder %v1275, 8.507059e+37
    %v1277 = vand.u32 %v1265, 2147483648
    %v1278 = vor.u32 1.1754944e-38, %v1277
    %v1279 = vsel %vm1276, %v1278, %v1274
    %v1280 = vmul.f32 1.0, %v1279
    %v1281 = vtanh.pop %v1241
    %v1282 = vxor.u32 %v1242, 2147483648
    %v1283 = vmul.f32 %v1282, 1.442695
    %v1284 = vpow.pop %v1283
    %v1285 = vadd.f32 %v1284, 1.0
    %v1286 = vrcp.pop %v1285
    %v1287 = vmul.f32 %v1285, %v1286
    %v1288 = vsub.f32 1.0, %v1287
    %v1289 = vmul.f32 %v1286, %v1288
    %v1290 = vadd.f32 %v1286, %v1289
    %vm1291 = vweird.f32 %v1285
    %vm1292 = vweird.f32 %v1286
    %vm1293 = vmor %vm1291, %vm1292
    %v1294 = vsel %vm1293, %v1286, %v1290
    %v1295 = vand.u32 2147483647, %v1285
    %vm1296 = vcmp.eq.f32.partialorder %v1295, 8.507059e+37
    %v1297 = vand.u32 %v1285, 2147483648
    %v1298 = vor.u32 1.1754944e-38, %v1297
    %v1299 = vsel %vm1296, %v1298, %v1294
    %v1300 = vmul.f32 1.0, %v1299
    %v1302 = vrot.slane %v1168, 6
    %v1304 = vmul.f32 %v1280, %v1302
    %v1305 = vmul.f32 %v1261, %v1281
    %v1306 = vadd.f32 %v1304, %v1305
    %v1307 = vtanh.pop %v1306
    %v1308 = vmul.f32 %v1300, %v1307
    %v1309 = vpack.c.bf16 %v1308, %v1308
    %v1311 = vrot.slane %v1309, 2
    %1313 = vmatpush.bf16.msra.mxu0 %v344
    %1314 = vmatpush.bf16.msra.mxu0 %v340
    %1315 = vmatpush.bf16.msra.mxu0 %v336
    %1316 = vmatpush.bf16.msra.mxu0 %v332
    %1317 = vmatpush.bf16.msra.mxu0 %v328
    %1318 = vmatpush.bf16.msra.mxu0 %v324
    %1319 = vmatpush.bf16.msra.mxu0 %v320
    %1320 = vmatpush.bf16.msra.mxu0 %v316
    %1321 = vmatmul.bf16.gmra.mxu0 %v1311
    %v1322 = vpop.f32.mrf.mxu0
    %v1323 = vadd.f32 0.0, %v1322
    %v1324 = vpop.f32.mrf.mxu0
    %1325 = vdwg.mxu0
    %1326 = vmatpush.bf16.msra.mxu0 %v345
    %1327 = vmatpush.bf16.msra.mxu0 %v341
    %1328 = vmatpush.bf16.msra.mxu0 %v337
    %1329 = vmatpush.bf16.msra.mxu0 %v333
    %1330 = vmatpush.bf16.msra.mxu0 %v329
    %1331 = vmatpush.bf16.msra.mxu0 %v325
    %1332 = vmatpush.bf16.msra.mxu0 %v321
    %1333 = vmatpush.bf16.msra.mxu0 %v317
    %1334 = vmatmul.bf16.gmra.mxu0 %v1311
    %v1335 = vpop.f32.mrf.mxu0
    %v1336 = vadd.f32 0.0, %v1335
    %v1337 = vpop.f32.mrf.mxu0
    %1338 = vdwg.mxu0
    %1339 = vmatpush.bf16.msra.mxu0 %v346
    %1340 = vmatpush.bf16.msra.mxu0 %v342
    %1341 = vmatpush.bf16.msra.mxu0 %v338
    %1342 = vmatpush.bf16.msra.mxu0 %v334
    %1343 = vmatpush.bf16.msra.mxu0 %v330
    %1344 = vmatpush.bf16.msra.mxu0 %v326
    %1345 = vmatpush.bf16.msra.mxu0 %v322
    %1346 = vmatpush.bf16.msra.mxu0 %v318
    %1347 = vmatmul.bf16.gmra.mxu0 %v1311
    %v1348 = vpop.f32.mrf.mxu0
    %v1349 = vadd.f32 0.0, %v1348
    %v1350 = vpop.f32.mrf.mxu0
    %1351 = vdwg.mxu0
    %1352 = vmatpush.bf16.msra.mxu0 %v347
    %1353 = vmatpush.bf16.msra.mxu0 %v343
    %1354 = vmatpush.bf16.msra.mxu0 %v339
    %1355 = vmatpush.bf16.msra.mxu0 %v335
    %1356 = vmatpush.bf16.msra.mxu0 %v331
    %1357 = vmatpush.bf16.msra.mxu0 %v327
    %1358 = vmatpush.bf16.msra.mxu0 %v323
    %1359 = vmatpush.bf16.msra.mxu0 %v319
    %1360 = vmatmul.bf16.gmra.mxu0 %v1311
    %v1361 = vpop.f32.mrf.mxu0
    %v1362 = vadd.f32 0.0, %v1361
    %v1363 = vpop.f32.mrf.mxu0
    %1364 = vdwg.mxu0
    %v1369 = vrot.slane %v1323, 2
    %v1370 = vrot.slane %v1336, 2
    %v1371 = vrot.slane %v1349, 2
    %v1372 = vrot.slane %v1362, 2
    %v1377 = vadd.f32 %v176, %v1369
    %v1378 = vadd.f32 %v190, %v1370
    %v1379 = vadd.f32 %v204, %v1371
    %v1380 = vadd.f32 %v218, %v1372
    %v1381 = vxor.u32 %v1377, 2147483648
    %v1382 = vmul.f32 %v1381, 1.442695
    %v1383 = vpow.pop %v1382
    %v1384 = vadd.f32 %v1383, 1.0
    %v1385 = vrcp.pop %v1384
    %v1386 = vmul.f32 %v1384, %v1385
    %v1387 = vsub.f32 1.0, %v1386
    %v1388 = vmul.f32 %v1385, %v1387
    %v1389 = vadd.f32 %v1385, %v1388
    %vm1390 = vweird.f32 %v1384
    %vm1391 = vweird.f32 %v1385
    %vm1392 = vmor %vm1390, %vm1391
    %v1393 = vsel %vm1392, %v1385, %v1389
    %v1394 = vand.u32 2147483647, %v1384
    %vm1395 = vcmp.eq.f32.partialorder %v1394, 8.507059e+37
    %v1396 = vand.u32 %v1384, 2147483648
    %v1397 = vor.u32 1.1754944e-38, %v1396
    %v1398 = vsel %vm1395, %v1397, %v1393
    %v1399 = vmul.f32 1.0, %v1398
    %v1400 = vxor.u32 %v1378, 2147483648
    %v1401 = vmul.f32 %v1400, 1.442695
    %v1402 = vpow.pop %v1401
    %v1403 = vadd.f32 %v1402, 1.0
    %v1404 = vrcp.pop %v1403
    %v1405 = vmul.f32 %v1403, %v1404
    %v1406 = vsub.f32 1.0, %v1405
    %v1407 = vmul.f32 %v1404, %v1406
    %v1408 = vadd.f32 %v1404, %v1407
    %vm1409 = vweird.f32 %v1403
    %vm1410 = vweird.f32 %v1404
    %vm1411 = vmor %vm1409, %vm1410
    %v1412 = vsel %vm1411, %v1404, %v1408
    %v1413 = vand.u32 2147483647, %v1403
    %vm1414 = vcmp.eq.f32.partialorder %v1413, 8.507059e+37
    %v1415 = vand.u32 %v1403, 2147483648
    %v1416 = vor.u32 1.1754944e-38, %v1415
    %v1417 = vsel %vm1414, %v1416, %v1412
    %v1418 = vmul.f32 1.0, %v1417
    %v1419 = vtanh.pop %v1379
    %v1420 = vxor.u32 %v1380, 2147483648
    %v1421 = vmul.f32 %v1420, 1.442695
    %v1422 = vpow.pop %v1421
    %v1423 = vadd.f32 %v1422, 1.0
    %v1424 = vrcp.pop %v1423
    %v1425 = vmul.f32 %v1423, %v1424
    %v1426 = vsub.f32 1.0, %v1425
    %v1427 = vmul.f32 %v1424, %v1426
    %v1428 = vadd.f32 %v1424, %v1427
    %vm1429 = vweird.f32 %v1423
    %vm1430 = vweird.f32 %v1424
    %vm1431 = vmor %vm1429, %vm1430
    %v1432 = vsel %vm1431, %v1424, %v1428
    %v1433 = vand.u32 2147483647, %v1423
    %vm1434 = vcmp.eq.f32.partialorder %v1433, 8.507059e+37
    %v1435 = vand.u32 %v1423, 2147483648
    %v1436 = vor.u32 1.1754944e-38, %v1435
    %v1437 = vsel %vm1434, %v1436, %v1432
    %v1438 = vmul.f32 1.0, %v1437
    %v1440 = vrot.slane %v1306, 6
    %v1442 = vmul.f32 %v1418, %v1440
    %v1443 = vmul.f32 %v1399, %v1419
    %v1444 = vadd.f32 %v1442, %v1443
    %v1445 = vtanh.pop %v1444
    %v1446 = vmul.f32 %v1438, %v1445
    %v1447 = vld [vmem:[%s1] sm:$0x3]
    %v1448 = vpack.c.bf16 %v1446, %v1446
    %v1449 = vld [vmem:[#allocation5] sm:$0xff]
    %v1450 = vld [vmem:[#allocation5 + $0x8] sm:$0xff]
    %v1451 = vld [vmem:[#allocation5 + $0x10] sm:$0xff]
    %v1452 = vld [vmem:[#allocation5 + $0x18] sm:$0xff]
    %v1453 = vld [vmem:[#allocation5 + $0x20] sm:$0xff]
    %v1454 = vld [vmem:[#allocation5 + $0x28] sm:$0xff]
    %v1455 = vld [vmem:[#allocation5 + $0x30] sm:$0xff]
    %v1456 = vld [vmem:[#allocation5 + $0x38] sm:$0xff]
    %v1457 = vld [vmem:[#allocation5 + $0x40] sm:$0xff]
    %v1458 = vld [vmem:[#allocation5 + $0x48] sm:$0xff]
    %v1459 = vld [vmem:[#allocation5 + $0x50] sm:$0xff]
    %v1460 = vld [vmem:[#allocation5 + $0x58] sm:$0xff]
    %v1461 = vld [vmem:[#allocation5 + $0x60] sm:$0xff]
    %v1462 = vld [vmem:[#allocation5 + $0x68] sm:$0xff]
    %v1463 = vld [vmem:[#allocation5 + $0x70] sm:$0xff]
    %v1464 = vld [vmem:[#allocation5 + $0x78] sm:$0xff]
    %v1465 = vpack.c.bf16 %v1447, %v1447
    %v1466 = vld [vmem:[%s6] sm:$0xf]
    %1468 = vst [vmem:[#allocation1] ss:$4 sm:$0xff] %v1466
    %v1469 = vld.sshfl [vmem:[#allocation1] sm:$0xff pattern:$0x73625140]
    %v1470 = vld.sshfl [vmem:[#allocation1 + $0x8] sm:$0xff pattern:$0x73625140]
    %vm1471 = vcmask 31744
    %v1473 = vsel %vm1471, %v1465, 0
    %vm1475 = vcmask 1041408
    %v1476 = vsel %vm1475, %v1469, 0
    %v1478 = vsel %vm1475, %v1470, 0
    %1480 = vmatpush.bf16.msra.mxu0 0
    %1481 = vmatpush.bf16.msra.mxu0 0
    %1482 = vmatpush.bf16.msra.mxu0 0
    %1483 = vmatpush.bf16.msra.mxu0 0
    %1484 = vmatpush.bf16.msra.mxu0 0
    %1485 = vmatpush.bf16.msra.mxu0 0
    %1486 = vmatpush.bf16.msra.mxu0 0
    %1487 = vmatpush.bf16.msra.mxu0 %v1476
    %1488 = vmatmul.bf16.gmra.mxu0 %v1473
    %v1489 = vpop.f32.mrf.mxu0
    %v1490 = vadd.f32 0.0, %v1489
    %v1491 = vpop.f32.mrf.mxu0
    %1492 = vdwg.mxu0
    %1493 = vmatpush.bf16.msra.mxu0 0
    %1494 = vmatpush.bf16.msra.mxu0 0
    %1495 = vmatpush.bf16.msra.mxu0 0
    %1496 = vmatpush.bf16.msra.mxu0 0
    %1497 = vmatpush.bf16.msra.mxu0 0
    %1498 = vmatpush.bf16.msra.mxu0 0
    %1499 = vmatpush.bf16.msra.mxu0 0
    %1500 = vmatpush.bf16.msra.mxu0 %v1478
    %1501 = vmatmul.bf16.gmra.mxu0 %v1473
    %v1502 = vpop.f32.mrf.mxu0
    %v1503 = vadd.f32 0.0, %v1502
    %v1504 = vpop.f32.mrf.mxu0
    %1505 = vdwg.mxu0
    %v1507 = vrot.slane %v1448, 3
    %v1525 = vunpack.c.l.b16 %v1449
    %v1526 = vunpack.c.h.b16 %v1449
    %v1527 = vunpack.c.l.b16 %v1450
    %v1528 = vunpack.c.h.b16 %v1450
    %v1529 = vunpack.c.l.b16 %v1451
    %v1530 = vunpack.c.h.b16 %v1451
    %v1531 = vunpack.c.l.b16 %v1452
    %v1532 = vunpack.c.h.b16 %v1452
    %v1533 = vunpack.c.l.b16 %v1453
    %v1534 = vunpack.c.h.b16 %v1453
    %v1535 = vunpack.c.l.b16 %v1454
    %v1536 = vunpack.c.h.b16 %v1454
    %v1537 = vunpack.c.l.b16 %v1455
    %v1538 = vunpack.c.h.b16 %v1455
    %v1539 = vunpack.c.l.b16 %v1456
    %v1540 = vunpack.c.h.b16 %v1456
    %v1541 = vunpack.c.l.b16 %v1457
    %v1542 = vunpack.c.h.b16 %v1457
    %v1543 = vunpack.c.l.b16 %v1458
    %v1544 = vunpack.c.h.b16 %v1458
    %v1545 = vunpack.c.l.b16 %v1459
    %v1546 = vunpack.c.h.b16 %v1459
    %v1547 = vunpack.c.l.b16 %v1460
    %v1548 = vunpack.c.h.b16 %v1460
    %v1549 = vunpack.c.l.b16 %v1461
    %v1550 = vunpack.c.h.b16 %v1461
    %v1551 = vunpack.c.l.b16 %v1462
    %v1552 = vunpack.c.h.b16 %v1462
    %v1553 = vunpack.c.l.b16 %v1463
    %v1554 = vunpack.c.h.b16 %v1463
    %v1555 = vunpack.c.l.b16 %v1464
    %v1556 = vunpack.c.h.b16 %v1464
    %v1557 = vpack.c.b16 %v1527, %v1525
    %v1558 = vpack.c.b16 %v1528, %v1526
    %v1559 = vpack.c.b16 %v1531, %v1529
    %v1560 = vpack.c.b16 %v1532, %v1530
    %v1561 = vpack.c.b16 %v1535, %v1533
    %v1562 = vpack.c.b16 %v1536, %v1534
    %v1563 = vpack.c.b16 %v1539, %v1537
    %v1564 = vpack.c.b16 %v1540, %v1538
    %v1565 = vpack.c.b16 %v1543, %v1541
    %v1566 = vpack.c.b16 %v1544, %v1542
    %v1567 = vpack.c.b16 %v1547, %v1545
    %v1568 = vpack.c.b16 %v1548, %v1546
    %v1569 = vpack.c.b16 %v1551, %v1549
    %v1570 = vpack.c.b16 %v1552, %v1550
    %v1571 = vpack.c.b16 %v1555, %v1553
    %v1572 = vpack.c.b16 %v1556, %v1554
    %1589 = vmatpush.bf16.msra.mxu0 %v1571
    %1590 = vmatpush.bf16.msra.mxu0 %v1569
    %1591 = vmatpush.bf16.msra.mxu0 %v1567
    %1592 = vmatpush.bf16.msra.mxu0 %v1565
    %1593 = vmatpush.bf16.msra.mxu0 %v1563
    %1594 = vmatpush.bf16.msra.mxu0 %v1561
    %1595 = vmatpush.bf16.msra.mxu0 %v1559
    %1596 = vmatpush.bf16.msra.mxu0 %v1557
    %1597 = vmatmul.bf16.gmra.mxu0 %v1507
    %v1598 = vpop.f32.mrf.mxu0
    %v1599 = vadd.f32 %v1490, %v1598
    %v1600 = vpop.f32.mrf.mxu0
    %1601 = vdwg.mxu0
    %1602 = vmatpush.bf16.msra.mxu0 %v1572
    %1603 = vmatpush.bf16.msra.mxu0 %v1570
    %1604 = vmatpush.bf16.msra.mxu0 %v1568
    %1605 = vmatpush.bf16.msra.mxu0 %v1566
    %1606 = vmatpush.bf16.msra.mxu0 %v1564
    %1607 = vmatpush.bf16.msra.mxu0 %v1562
    %1608 = vmatpush.bf16.msra.mxu0 %v1560
    %1609 = vmatpush.bf16.msra.mxu0 %v1558
    %1610 = vmatmul.bf16.gmra.mxu0 %v1507
    %v1611 = vpop.f32.mrf.mxu0
    %v1612 = vadd.f32 %v1503, %v1611
    %v1613 = vpop.f32.mrf.mxu0
    %1614 = vdwg.mxu0
    %v1615 = vld [vmem:[%s7] sm:$0x3]
    %v1617 = vperm.slane %v1615, 0
    %v1618 = vperm.slane %v1615, 1
    %v1621 = vadd.f32 %v1599, %v1617
    %v1622 = vadd.f32 %v1612, %v1618
    %v1623 = vmax.f32 %v1621, 0.0
    %v1624 = vmax.f32 %v1622, 0.0
    %v1625 = vpack.c.bf16 %v1623, %v1623
    %v1626 = vpack.c.bf16 %v1624, %v1624
    %v1627 = vld [vmem:[#allocation7] sm:$0xf]
    %v1628 = vld [vmem:[#allocation7 + $0x4] sm:$0xf]
    %v1629 = vld [vmem:[#allocation7 + $0x8] sm:$0xf]
    %v1630 = vld [vmem:[#allocation7 + $0xc] sm:$0xf]
    %v1631 = vld [vmem:[#allocation7 + $0x10] sm:$0xf]
    %v1632 = vld [vmem:[#allocation7 + $0x14] sm:$0xf]
    %v1633 = vld [vmem:[#allocation7 + $0x18] sm:$0xf]
    %v1634 = vld [vmem:[#allocation7 + $0x1c] sm:$0xf]
    %v1635 = vld [vmem:[#allocation7 + $0x20] sm:$0xf]
    %v1636 = vld [vmem:[#allocation7 + $0x24] sm:$0xf]
    %v1637 = vld [vmem:[#allocation7 + $0x28] sm:$0xf]
    %v1638 = vld [vmem:[#allocation7 + $0x2c] sm:$0xf]
    %v1639 = vld [vmem:[#allocation7 + $0x30] sm:$0xf]
    %v1640 = vld [vmem:[#allocation7 + $0x34] sm:$0xf]
    %v1641 = vld [vmem:[#allocation7 + $0x38] sm:$0xf]
    %v1642 = vld [vmem:[#allocation7 + $0x3c] sm:$0xf]
    %v1643 = vld [vmem:[#allocation7 + $0x40] sm:$0xf]
    %v1644 = vld [vmem:[#allocation7 + $0x44] sm:$0xf]
    %v1645 = vld [vmem:[#allocation7 + $0x48] sm:$0xf]
    %v1646 = vld [vmem:[#allocation7 + $0x4c] sm:$0xf]
    %v1647 = vld [vmem:[#allocation7 + $0x50] sm:$0xf]
    %v1648 = vld [vmem:[#allocation7 + $0x54] sm:$0xf]
    %v1649 = vld [vmem:[#allocation7 + $0x58] sm:$0xf]
    %v1650 = vld [vmem:[#allocation7 + $0x5c] sm:$0xf]
    %v1651 = vld [vmem:[#allocation7 + $0x60] sm:$0xf]
    %v1652 = vld [vmem:[#allocation7 + $0x64] sm:$0xf]
    %v1653 = vld [vmem:[#allocation7 + $0x68] sm:$0xf]
    %v1654 = vld [vmem:[#allocation7 + $0x6c] sm:$0xf]
    %v1655 = vld [vmem:[#allocation7 + $0x70] sm:$0xf]
    %v1656 = vld [vmem:[#allocation7 + $0x74] sm:$0xf]
    %v1657 = vld [vmem:[#allocation7 + $0x78] sm:$0xf]
    %v1658 = vld [vmem:[#allocation7 + $0x7c] sm:$0xf]
    %v1659 = vld [vmem:[%s9] sm:$0x1]
    %v1661 = vperm.slane %v1659, 0
    %v1695 = vunpack.c.l.b16 %v1627
    %v1696 = vunpack.c.l.b16 %v1628
    %v1697 = vunpack.c.l.b16 %v1629
    %v1698 = vunpack.c.l.b16 %v1630
    %v1699 = vunpack.c.l.b16 %v1631
    %v1700 = vunpack.c.l.b16 %v1632
    %v1701 = vunpack.c.l.b16 %v1633
    %v1702 = vunpack.c.l.b16 %v1634
    %v1703 = vunpack.c.l.b16 %v1635
    %v1704 = vunpack.c.l.b16 %v1636
    %v1705 = vunpack.c.l.b16 %v1637
    %v1706 = vunpack.c.l.b16 %v1638
    %v1707 = vunpack.c.l.b16 %v1639
    %v1708 = vunpack.c.l.b16 %v1640
    %v1709 = vunpack.c.l.b16 %v1641
    %v1710 = vunpack.c.l.b16 %v1642
    %v1711 = vunpack.c.l.b16 %v1643
    %v1712 = vunpack.c.l.b16 %v1644
    %v1713 = vunpack.c.l.b16 %v1645
    %v1714 = vunpack.c.l.b16 %v1646
    %v1715 = vunpack.c.l.b16 %v1647
    %v1716 = vunpack.c.l.b16 %v1648
    %v1717 = vunpack.c.l.b16 %v1649
    %v1718 = vunpack.c.l.b16 %v1650
    %v1719 = vunpack.c.l.b16 %v1651
    %v1720 = vunpack.c.l.b16 %v1652
    %v1721 = vunpack.c.l.b16 %v1653
    %v1722 = vunpack.c.l.b16 %v1654
    %v1723 = vunpack.c.l.b16 %v1655
    %v1724 = vunpack.c.l.b16 %v1656
    %v1725 = vunpack.c.l.b16 %v1657
    %v1726 = vunpack.c.l.b16 %v1658
    %v1727 = vpack.c.b16 %v1696, %v1695
    %v1728 = vpack.c.b16 %v1698, %v1697
    %v1729 = vpack.c.b16 %v1700, %v1699
    %v1730 = vpack.c.b16 %v1702, %v1701
    %v1731 = vpack.c.b16 %v1704, %v1703
    %v1732 = vpack.c.b16 %v1706, %v1705
    %v1733 = vpack.c.b16 %v1708, %v1707
    %v1734 = vpack.c.b16 %v1710, %v1709
    %v1735 = vpack.c.b16 %v1712, %v1711
    %v1736 = vpack.c.b16 %v1714, %v1713
    %v1737 = vpack.c.b16 %v1716, %v1715
    %v1738 = vpack.c.b16 %v1718, %v1717
    %v1739 = vpack.c.b16 %v1720, %v1719
    %v1740 = vpack.c.b16 %v1722, %v1721
    %v1741 = vpack.c.b16 %v1724, %v1723
    %v1742 = vpack.c.b16 %v1726, %v1725
    %1759 = vmatpush.bf16.msra.mxu0 %v1734
    %1760 = vmatpush.bf16.msra.mxu0 %v1733
    %1761 = vmatpush.bf16.msra.mxu0 %v1732
    %1762 = vmatpush.bf16.msra.mxu0 %v1731
    %1763 = vmatpush.bf16.msra.mxu0 %v1730
    %1764 = vmatpush.bf16.msra.mxu0 %v1729
    %1765 = vmatpush.bf16.msra.mxu0 %v1728
    %1766 = vmatpush.bf16.msra.mxu0 %v1727
    %1767 = vmatmul.bf16.gmra.mxu0 %v1625
    %v1768 = vpop.f32.mrf.mxu0
    %v1769 = vadd.f32 %v1661, %v1768
    %v1770 = vpop.f32.mrf.mxu0
    %1771 = vdwg.mxu0
    %1772 = vmatpush.bf16.msra.mxu0 %v1742
    %1773 = vmatpush.bf16.msra.mxu0 %v1741
    %1774 = vmatpush.bf16.msra.mxu0 %v1740
    %1775 = vmatpush.bf16.msra.mxu0 %v1739
    %1776 = vmatpush.bf16.msra.mxu0 %v1738
    %1777 = vmatpush.bf16.msra.mxu0 %v1737
    %1778 = vmatpush.bf16.msra.mxu0 %v1736
    %1779 = vmatpush.bf16.msra.mxu0 %v1735
    %1780 = vmatmul.bf16.gmra.mxu0 %v1626
    %v1781 = vpop.f32.mrf.mxu0
    %v1782 = vadd.f32 %v1769, %v1781
    %v1783 = vpop.f32.mrf.mxu0
    %1784 = vdwg.mxu0
    %v1785 = vmax.f32 %v1782, 0.0
    %v1786 = vld [vmem:[%s10] sm:$0x1]
    %v1788 = vperm.slane %v1786, 0
    %v1790 = vmul.f32 %v1785, %v1788
    %v1791 = vsel %vm1475, %v1790, 0.0
    %1792 = vadd.xlane.f32.xlu0 %v1791
    %v1793 = vpop.xlane.xlu0 %1792
    %v1794 = vld [vmem:[#allocation2] sm:$0x1]
    %v1796 = vperm.slane %v1794, 0
    %v1798 = vadd.f32 %v1793, %v1796
    %vm1799 = vcmask 1024
    %1800 = vst.msk [vmem:[%s12] sm:$0x3] %vm1799, %v1798
    // Predicated region
    $region62: #{critic_forward.1} parent=1 // pred_check
      _
    $region63: #{critic_forward.1} parent=1 // pred_check_branch
      %1802 = sbr.rel (0) target = $region65
    $region64: #{critic_forward.1} parent=1 // pred_region
      _
    $region65: #{critic_forward.1} parent=1 // pred_fallthru
      _
    // Predicated region
    $region66: #{critic_forward.1} parent=1 // pred_check
      _
    $region67: #{critic_forward.1} parent=1 // pred_check_branch
      %1804 = sbr.rel (0) target = $region69
    $region68: #{critic_forward.1} parent=1 // pred_region
      _
    $region69: #{critic_forward.1} parent=1 // pred_fallthru
      _
    %1805 = vsyncpa [#allocation4], 1
    %1806 = vsyncpa [#allocation6], 1

</llo_original>
